<compile_context>
chip_gen: v6e
topology: v6e:2x2x1
jax: 0.10.0
libtpu: 0.0.40
codegen_flags: <defaults>
</compile_context>

<pallas_src>
import functools

import jax
import jax.numpy as jnp
from jax import lax
from jax.experimental import pallas as pl
from jax.experimental.pallas import tpu as pltpu

MIN_VALUE = 1e-8
BN_EPS = 1e-5
HIDDEN = 256
_TILE_ROWS = 512          # rows per batch tile in the tiled path (>=512 for v5e)
_FUSED_MAX_ROWS = 4096    # upper bound for the single fused-kernel path


def _round_up(v, m):
    return (v + m - 1) // m * m


def _physical_vmem_bytes():
    try:
        return int(pltpu.get_tpu_info().vmem_capacity_bytes)
    except Exception:
        return 64 * 1024 * 1024       # v7x-conservative fallback


def _vmem_limit(needed, physical):
    return int(min(max(needed + needed // 4, 32 * 1024 * 1024),
                   physical * 9 // 10))


def _supports_pipeline_mode():
    # Feature-detect BlockSpec(pipeline_mode=pl.Buffered(1)); fall back to the
    # default (double-buffered) spec if the installed JAX rejects it.
    try:
        pl.BlockSpec((8, 128), lambda i: (0, 0), pipeline_mode=pl.Buffered(1))
        return True
    except Exception:
        return False


_HAS_BUFFERED = _supports_pipeline_mode()


def _resident_spec(shape):
    """Full-array block whose index never changes across the grid.

    Single-buffered (pl.Buffered(1)) when supported: grid-invariant blocks and
    grid=(1,) blocks gain nothing from double buffering, so this halves their
    resident VMEM footprint (most valuable on v7x's 64 MiB VMEM).
    """
    nd = len(shape)
    index_map = lambda i, _nd=nd: (0,) * _nd
    if _HAS_BUFFERED:
        return pl.BlockSpec(shape, index_map, pipeline_mode=pl.Buffered(1))
    return pl.BlockSpec(shape, index_map)


# ---------------------------------------------------------------------------
# Path A: single fused kernel (whole batch resident in VMEM).
# ---------------------------------------------------------------------------
def _fused_mlp_kernel(x_ref,
                      w1_ref, g1_ref, be1_ref,
                      w2_ref, g2_ref, be2_ref,
                      w3_ref, g3_ref, be3_ref,
                      w4_ref, b4_ref,
                      out_ref, *, n_rows):
    ones = jnp.ones((1, n_rows), jnp.float32)
    inv_n = jnp.float32(1.0 / n_rows)

    def bn_relu(z, g_ref, be_ref):
        # Batch reductions as thin MXU dots (keeps the XLU free); centered
        # second pass for the variance (avoids E[z^2]-E[z]^2 cancellation).
        mu = jnp.dot(ones, z, preferred_element_type=jnp.float32) * inv_n
        zc = z - mu
        var = jnp.dot(ones, zc * zc, preferred_element_type=jnp.float32) * inv_n
        scale = g_ref[...] * lax.rsqrt(var + BN_EPS)
        return jnp.maximum(zc * scale + be_ref[...], 0.0)

    # x: f32 HBM read, bf16 MXU operand (cast in-kernel, no extra HBM pass).
    # Linear biases b1-b3 are omitted: exactly cancelled by train-mode BN.
    h = x_ref[...].astype(jnp.bfloat16)
    z = jnp.dot(h, w1_ref[...], preferred_element_type=jnp.float32)
    h = bn_relu(z, g1_ref, be1_ref).astype(jnp.bfloat16)
    z = jnp.dot(h, w2_ref[...], preferred_element_type=jnp.float32)
    h = bn_relu(z, g2_ref, be2_ref).astype(jnp.bfloat16)
    z = jnp.dot(h, w3_ref[...], preferred_element_type=jnp.float32)
    h = bn_relu(z, g3_ref, be3_ref).astype(jnp.bfloat16)
    out = jnp.dot(h, w4_ref[...], preferred_element_type=jnp.float32)
    out_ref[...] = out + b4_ref[...]        # lane-padded -> unmasked stores


def _fused_vmem_estimate(n, input_dim, out_dim_p):
    # x block + padded output block + ~5 live [n, HIDDEN] f32 temps + headroom.
    per_row = 4 * input_dim + 4 * out_dim_p + 5 * 4 * HIDDEN
    return n * per_row + (2 << 20)


def _fused_forward(x, prep, out_dim_p, physical_vmem):
    n, input_dim = x.shape
    operands = [x,
                prep["w1"], prep["g1"], prep["be1"],
                prep["w2"], prep["g2"], prep["be2"],
                prep["w3"], prep["g3"], prep["be3"],
                prep["w4"], prep["b4"]]
    return pl.pallas_call(
        functools.partial(_fused_mlp_kernel, n_rows=n),
        out_shape=jax.ShapeDtypeStruct((n, out_dim_p), jnp.float32),
        grid_spec=pltpu.PrefetchScalarGridSpec(
            num_scalar_prefetch=0,
            grid=(1,),
            in_specs=[_resident_spec(op.shape) for op in operands],
            out_specs=_resident_spec((n, out_dim_p)),
        ),
        compiler_params=pltpu.CompilerParams(
            dimension_semantics=("arbitrary",),
            vmem_limit_bytes=_vmem_limit(
                _fused_vmem_estimate(n, input_dim, out_dim_p), physical_vmem)),
    )(*operands)


# ---------------------------------------------------------------------------
# Path B: batch-tiled two-sweep BatchNorm pipeline (large n).
# ---------------------------------------------------------------------------
def _first_pass_kernel(x_ref, w_ref, z_ref, stats_ref, *, rows_per_tile):
    ones = jnp.ones((1, rows_per_tile), jnp.float32)
    z = jnp.dot(x_ref[...].astype(jnp.bfloat16), w_ref[...],
                preferred_element_type=jnp.float32)
    # Per-tile stats via thin MXU dots.  Batch-padding rows of x are zero and
    # there is no linear bias, so they contribute exactly zero here.
    s = jnp.dot(ones, z, preferred_element_type=jnp.float32)
    ss = jnp.dot(ones, z * z, preferred_element_type=jnp.float32)
    z_ref[...] = z.astype(jnp.bfloat16)
    stats_ref[...] = jnp.concatenate([s, ss], axis=0)[None, :, :]


def _mid_pass_kernel(zin_ref, scale_ref, shift_ref, w_ref, z_ref, stats_ref, *,
                     rows_per_tile, n_valid, mask_rows):
    ones = jnp.ones((1, rows_per_tile), jnp.float32)
    h = jnp.maximum(zin_ref[...].astype(jnp.float32) * scale_ref[...]
                    + shift_ref[...], 0.0)
    if mask_rows:
        # Zero batch-padding rows so they cannot pollute the next layer stats.
        row = (lax.broadcasted_iota(jnp.int32, (rows_per_tile, 1), 0)
               + pl.program_id(0) * rows_per_tile)
        h = jnp.where(row < n_valid, h, 0.0)
    z = jnp.dot(h.astype(jnp.bfloat16), w_ref[...],
                preferred_element_type=jnp.float32)
    s = jnp.dot(ones, z, preferred_element_type=jnp.float32)
    ss = jnp.dot(ones, z * z, preferred_element_type=jnp.float32)
    z_ref[...] = z.astype(jnp.bfloat16)
    stats_ref[...] = jnp.concatenate([s, ss], axis=0)[None, :, :]


def _last_pass_kernel(zin_ref, scale_ref, shift_ref, w_ref, b_ref, out_ref):
    h = jnp.maximum(zin_ref[...].astype(jnp.float32) * scale_ref[...]
                    + shift_ref[...], 0.0)
    out = jnp.dot(h.astype(jnp.bfloat16), w_ref[...],
                  preferred_element_type=jnp.float32)
    out_ref[...] = out + b_ref[...]


def _finalize_bn(stats, g, be, n):
    """Per-tile [sum, sum_sq] partials -> per-feature (scale, shift)."""
    sums = jnp.sum(stats, axis=0)                       # [2, HIDDEN]
    mu = sums[0:1] / n
    var = jnp.maximum(sums[1:2] / n - mu * mu, 0.0)     # biased var (PyTorch)
    scale = g * lax.rsqrt(var + BN_EPS)
    shift = be - mu * scale
    return scale, shift


def _tiled_forward(x, prep, out_dim_p, physical_vmem):
    n, input_dim = x.shape
    tn = _TILE_ROWS
    pad_rows = -n % tn
    xp = jnp.pad(x, ((0, pad_rows), (0, 0))) if pad_rows else x
    n_rows = n + pad_rows
    n_tiles = n_rows // tn

    tile_bytes = 2 * tn * (4 * input_dim + 20 * HIDDEN + 4 * out_dim_p) + (2 << 20)
    cparams = pltpu.CompilerParams(
        dimension_semantics=("parallel",),
        vmem_limit_bytes=_vmem_limit(tile_bytes, physical_vmem))

    z_shape = jax.ShapeDtypeStruct((n_rows, HIDDEN), jnp.bfloat16)
    st_shape = jax.ShapeDtypeStruct((n_tiles, 2, HIDDEN), jnp.float32)
    z_spec = pl.BlockSpec((tn, HIDDEN), lambda i: (i, 0))
    st_spec = pl.BlockSpec((1, 2, HIDDEN), lambda i: (i, 0, 0))

    # Pass 1: z1 = x @ w1 (bias cancelled by BN); stash z1 + per-tile stats.
    z1, st1 = pl.pallas_call(
        functools.partial(_first_pass_kernel, rows_per_tile=tn),
        out_shape=(z_shape, st_shape),
        grid_spec=pltpu.PrefetchScalarGridSpec(
            num_scalar_prefetch=0, grid=(n_tiles,),
            in_specs=[pl.BlockSpec((tn, input_dim), lambda i: (i, 0)),
                      _resident_spec(prep["w1"].shape)],
            out_specs=[z_spec, st_spec]),
        compiler_params=cparams,
    )(xp, prep["w1"])

    def mid_pass(z_prev, st_prev, g, be, w):
        scale, shift = _finalize_bn(st_prev, g, be, n)
        return pl.pallas_call(
            functools.partial(_mid_pass_kernel, rows_per_tile=tn, n_valid=n,
                              mask_rows=pad_rows > 0),
            out_shape=(z_shape, st_shape),
            grid_spec=pltpu.PrefetchScalarGridSpec(
                num_scalar_prefetch=0, grid=(n_tiles,),
                in_specs=[z_spec,
                          _resident_spec((1, HIDDEN)),
                          _resident_spec((1, HIDDEN)),
                          _resident_spec(w.shape)],
                out_specs=[z_spec, st_spec]),
            compiler_params=cparams,
        )(z_prev, scale, shift, w)

    z2, st2 = mid_pass(z1, st1, prep["g1"], prep["be1"], prep["w2"])
    z3, st3 = mid_pass(z2, st2, prep["g2"], prep["be2"], prep["w3"])

    scale3, shift3 = _finalize_bn(st3, prep["g3"], prep["be3"], n)
    pred_p = pl.pallas_call(
        _last_pass_kernel,
        out_shape=jax.ShapeDtypeStruct((n_rows, out_dim_p), jnp.float32),
        grid_spec=pltpu.PrefetchScalarGridSpec(
            num_scalar_prefetch=0, grid=(n_tiles,),
            in_specs=[z_spec,
                      _resident_spec((1, HIDDEN)),
                      _resident_spec((1, HIDDEN)),
                      _resident_spec(prep["w4"].shape),
                      _resident_spec(prep["b4"].shape)],
            out_specs=pl.BlockSpec((tn, out_dim_p), lambda i: (i, 0))),
        compiler_params=cparams,
    )(z3, scale3, shift3, prep["w4"], prep["b4"])
    return pred_p


# ---------------------------------------------------------------------------
# Public forward + parameter preparation.
# ---------------------------------------------------------------------------
@functools.partial(jax.jit, static_argnames=("y_dim", "force_path"))
def gaussian_regressor_forward(x, prep, y_dim, force_path=None):
    n, input_dim = x.shape
    out_dim = y_dim + y_dim * (y_dim + 1) // 2
    out_dim_p = prep["w4"].shape[1]

    physical_vmem = _physical_vmem_bytes()
    fits_fused = (n <= _FUSED_MAX_ROWS and
                  _fused_vmem_estimate(n, input_dim, out_dim_p)
                  <= physical_vmem * 8 // 10)
    use_fused = force_path == "fused" or (force_path is None and fits_fused)

    if use_fused:
        pred_p = _fused_forward(x, prep, out_dim_p, physical_vmem)
    else:
        pred_p = _tiled_forward(x, prep, out_dim_p, physical_vmem)

    pred = pred_p[:n, :out_dim]

    # ---- tiny tail (matches the PyTorch module exactly) ----
    loc = pred[:, :y_dim]
    diag = jax.nn.softplus(pred[:, y_dim:2 * y_dim]) + MIN_VALUE
    offdiag = pred[:, 2 * y_dim:]
    scale_tril = diag[:, :, None] * jnp.eye(y_dim, dtype=pred.dtype)[None]
    tr, tc = jnp.tril_indices(y_dim, k=-1)   # row-major, same as torch.tril_indices
    scale_tril = scale_tril.at[:, tr, tc].set(offdiag)
    return loc, scale_tril


def init_params(key, input_dim, y_dim):
    """Raw f32 parameters in the PyTorch module's layout ([in, out] weights)."""
    out_dim = y_dim + y_dim * (y_dim + 1) // 2
    dims = [(input_dim, HIDDEN), (HIDDEN, HIDDEN), (HIDDEN, HIDDEN),
            (HIDDEN, out_dim)]
    keys = jax.random.split(key, 8)
    params = {}
    for i, (din, dout) in enumerate(dims, start=1):
        scale = 1.0 / jnp.sqrt(jnp.float32(din))
        params[f"w{i}"] = (jax.random.normal(keys[2 * (i - 1)], (din, dout),
                                             jnp.float32) * scale)
        params[f"b{i}"] = (jax.random.normal(keys[2 * (i - 1) + 1], (dout,),
                                             jnp.float32) * 0.01)
    for i in range(1, 4):        # BatchNorm affine (PyTorch init: weight=1, bias=0)
        params[f"g{i}"] = jnp.ones((HIDDEN,), jnp.float32)
        params[f"be{i}"] = jnp.zeros((HIDDEN,), jnp.float32)
    return params


def prepare_params(params, y_dim):
    """One-time, outside-jit layout prep: bf16 weights, lane-padded final layer,
    [1, F]-shaped BN vectors.  b1-b3 are exactly cancelled by train-mode
    BatchNorm mean subtraction and are dropped.

    # TODO(synk): if run in eval mode (running stats), b1-b3 must be re-added
    # and running_mean/var used instead of batch statistics.
    """
    out_dim = y_dim + y_dim * (y_dim + 1) // 2
    o_pad = _round_up(out_dim, 128) - out_dim
    w4 = jnp.pad(params["w4"], ((0, 0), (0, o_pad))) if o_pad else params["w4"]
    b4 = jnp.pad(params["b4"], (0, o_pad)) if o_pad else params["b4"]
    row = lambda v: v.reshape(1, -1).astype(jnp.float32)
    prep = {
        "w1": params["w1"].astype(jnp.bfloat16),
        "w2": params["w2"].astype(jnp.bfloat16),
        "w3": params["w3"].astype(jnp.bfloat16),
        "w4": w4.astype(jnp.bfloat16),
        "b4": row(b4),
    }
    for i in range(1, 4):
        prep[f"g{i}"] = row(params[f"g{i}"])
        prep[f"be{i}"] = row(params[f"be{i}"])
    return jax.device_put(prep)


def _reference_forward(x, params, y_dim):
    """Pure-JAX f32 reference matching the PyTorch module (train-mode BN,
    biases included) - used to validate both kernel paths."""
    h = x
    for i in range(1, 4):
        z = h @ params[f"w{i}"] + params[f"b{i}"]
        mu = jnp.mean(z, axis=0, keepdims=True)
        var = jnp.mean((z - mu) ** 2, axis=0, keepdims=True)
        h = jnp.maximum((z - mu) / jnp.sqrt(var + BN_EPS)
                        * params[f"g{i}"] + params[f"be{i}"], 0.0)
    pred = h @ params["w4"] + params["b4"]
    loc = pred[:, :y_dim]
    diag = jax.nn.softplus(pred[:, y_dim:2 * y_dim]) + MIN_VALUE
    offdiag = pred[:, 2 * y_dim:]
    scale_tril = diag[:, :, None] * jnp.eye(y_dim, dtype=pred.dtype)[None]
    tr, tc = jnp.tril_indices(y_dim, k=-1)
    scale_tril = scale_tril.at[:, tr, tc].set(offdiag)
    return loc, scale_tril


if __name__ == "__main__":
    key = jax.random.PRNGKey(0)
    k_x, k_p, k_x2 = jax.random.split(key, 3)

    input_dim, y_dim = 32, 4
    params = init_params(k_p, input_dim, y_dim)
    prep = prepare_params(params, y_dim)          # one-time, outside jit

    # --- small batch -> fused single-kernel path ---
    n_small = 8
    x = jax.random.normal(k_x, (n_small, input_dim), jnp.float32)
    loc, scale_tril = gaussian_regressor_forward(x, prep, y_dim=y_dim)
    jax.block_until_ready((loc, scale_tril))

    assert loc.shape == (n_small, y_dim)
    assert scale_tril.shape == (n_small, y_dim, y_dim)
    assert bool(jnp.all(jnp.diagonal(scale_tril, axis1=1, axis2=2) > 0.0))
    assert bool(jnp.all(jnp.triu(scale_tril, k=1) == 0.0))
    loc_ref, st_ref = _reference_forward(x, params, y_dim)
    assert bool(jnp.allclose(loc, loc_ref, atol=1e-1, rtol=1e-1)), "fused loc mismatch"
    assert bool(jnp.allclose(scale_tril, st_ref, atol=1e-1, rtol=1e-1)), "fused tril mismatch"

    # --- larger, non-tile-aligned batch -> batch-tiled two-sweep-BN path ---
    n_big = 700
    x2 = jax.random.normal(k_x2, (n_big, input_dim), jnp.float32)
    loc_t, st_t = gaussian_regressor_forward(x2, prep, y_dim=y_dim,
                                             force_path="tiled")
    jax.block_until_ready((loc_t, st_t))

    assert loc_t.shape == (n_big, y_dim)
    assert st_t.shape == (n_big, y_dim, y_dim)
    assert bool(jnp.all(jnp.diagonal(st_t, axis1=1, axis2=2) > 0.0))
    assert bool(jnp.all(jnp.triu(st_t, k=1) == 0.0))
    loc_ref2, st_ref2 = _reference_forward(x2, params, y_dim)
    assert bool(jnp.allclose(loc_t, loc_ref2, atol=1e-1, rtol=1e-1)), "tiled loc mismatch"
    assert bool(jnp.allclose(st_t, st_ref2, atol=1e-1, rtol=1e-1)), "tiled tril mismatch"

    print("KERNEL_OK")
</pallas_src>

<mosaic_0001>
module attributes {stable_mosaic.version = 11 : i64} {
  func.func private @main(%arg0: i32) attributes {dimension_semantics = [#tpu.dimension_semantics<core_parallel>], iteration_bounds = array<i64: 2>, tpu.core_type = #tpu.core_type<sc_scalar_subcore>, window_params = []} {
    return
  }
}

module attributes {stable_mosaic.version = 11 : i64} {
  func.func private @main(%arg0: i32) attributes {dimension_semantics = [#tpu.dimension_semantics<core_parallel>], iteration_bounds = array<i64: 2>, tpu.core_type = #tpu.core_type<sc_scalar_subcore>, window_params = []} {
    return
  }
}

module attributes {stable_mosaic.version = 11 : i64} {
  func.func @_fused_mlp_kernel(%arg0: i32, %arg1: memref<8x32xf32, #tpu.memory_space<vmem>>, %arg2: memref<32x256xbf16, #tpu.memory_space<vmem>>, %arg3: memref<1x256xf32, #tpu.memory_space<vmem>>, %arg4: memref<1x256xf32, #tpu.memory_space<vmem>>, %arg5: memref<256x256xbf16, #tpu.memory_space<vmem>>, %arg6: memref<1x256xf32, #tpu.memory_space<vmem>>, %arg7: memref<1x256xf32, #tpu.memory_space<vmem>>, %arg8: memref<256x256xbf16, #tpu.memory_space<vmem>>, %arg9: memref<1x256xf32, #tpu.memory_space<vmem>>, %arg10: memref<1x256xf32, #tpu.memory_space<vmem>>, %arg11: memref<256x128xbf16, #tpu.memory_space<vmem>>, %arg12: memref<1x128xf32, #tpu.memory_space<vmem>>, %arg13: memref<8x128xf32, #tpu.memory_space<vmem>>) attributes {dimension_semantics = [#tpu.dimension_semantics<arbitrary>], iteration_bounds = array<i64: 1>, scalar_prefetch = 0 : i64, scratch_operands = 0 : i64, tpu.core_type = #tpu.core_type<tc>, window_params = [{pipeline_mode = #tpu.pipeline_mode<synchronous>, transform_indices = @transform_0, window_bounds = array<i64: 8, 32>}, {pipeline_mode = #tpu.pipeline_mode<synchronous>, transform_indices = @transform_1, window_bounds = array<i64: 32, 256>}, {pipeline_mode = #tpu.pipeline_mode<synchronous>, transform_indices = @transform_2, window_bounds = array<i64: 1, 256>}, {pipeline_mode = #tpu.pipeline_mode<synchronous>, transform_indices = @transform_3, window_bounds = array<i64: 1, 256>}, {pipeline_mode = #tpu.pipeline_mode<synchronous>, transform_indices = @transform_4, window_bounds = array<i64: 256, 256>}, {pipeline_mode = #tpu.pipeline_mode<synchronous>, transform_indices = @transform_5, window_bounds = array<i64: 1, 256>}, {pipeline_mode = #tpu.pipeline_mode<synchronous>, transform_indices = @transform_6, window_bounds = array<i64: 1, 256>}, {pipeline_mode = #tpu.pipeline_mode<synchronous>, transform_indices = @transform_7, window_bounds = array<i64: 256, 256>}, {pipeline_mode = #tpu.pipeline_mode<synchronous>, transform_indices = @transform_8, window_bounds = array<i64: 1, 256>}, {pipeline_mode = #tpu.pipeline_mode<synchronous>, transform_indices = @transform_9, window_bounds = array<i64: 1, 256>}, {pipeline_mode = #tpu.pipeline_mode<synchronous>, transform_indices = @transform_10, window_bounds = array<i64: 256, 128>}, {pipeline_mode = #tpu.pipeline_mode<synchronous>, transform_indices = @transform_11, window_bounds = array<i64: 1, 128>}, {pipeline_mode = #tpu.pipeline_mode<synchronous>, transform_indices = @transform_12, window_bounds = array<i64: 8, 128>}]} {
    %cst = arith.constant 1.000000e+00 : f32
    %0 = vector.broadcast %cst : f32 to vector<1x8xf32>
    %c0 = arith.constant 0 : index
    %c0_0 = arith.constant 0 : index
    %1 = vector.load %arg1[%c0, %c0_0] : memref<8x32xf32, #tpu.memory_space<vmem>>, vector<8x32xf32>
    %2 = arith.truncf %1 : vector<8x32xf32> to vector<8x32xbf16>
    %c0_1 = arith.constant 0 : index
    %c0_2 = arith.constant 0 : index
    %3 = vector.load %arg2[%c0_1, %c0_2] : memref<32x256xbf16, #tpu.memory_space<vmem>>, vector<32x256xbf16>
    %cst_3 = arith.constant dense<0.000000e+00> : vector<8x256xf32>
    %4 = tpu.matmul %2, %3, %cst_3 {dimension_numbers = #tpu.dot_dimension_numbers<[1], [0], [0], [1], [0, 0, 1, 1], [], []>} : vector<8x32xbf16>, vector<32x256xbf16>, vector<8x256xf32> -> vector<8x256xf32>
    %cst_4 = arith.constant dense<0.000000e+00> : vector<1x256xf32>
    %5 = tpu.matmul %0, %4, %cst_4 {dimension_numbers = #tpu.dot_dimension_numbers<[1], [0], [0], [1], [0, 0, 1, 1], [], []>} : vector<1x8xf32>, vector<8x256xf32>, vector<1x256xf32> -> vector<1x256xf32>
    %cst_5 = arith.constant 1.250000e-01 : f32
    %6 = vector.broadcast %cst_5 : f32 to vector<1x256xf32>
    %7 = arith.mulf %5, %6 : vector<1x256xf32>
    %8 = vector.broadcast %7 : vector<1x256xf32> to vector<8x256xf32>
    %9 = arith.subf %4, %8 : vector<8x256xf32>
    %10 = arith.mulf %9, %9 : vector<8x256xf32>
    %cst_6 = arith.constant dense<0.000000e+00> : vector<1x256xf32>
    %11 = tpu.matmul %0, %10, %cst_6 {dimension_numbers = #tpu.dot_dimension_numbers<[1], [0], [0], [1], [0, 0, 1, 1], [], []>} : vector<1x8xf32>, vector<8x256xf32>, vector<1x256xf32> -> vector<1x256xf32>
    %cst_7 = arith.constant 1.250000e-01 : f32
    %12 = vector.broadcast %cst_7 : f32 to vector<1x256xf32>
    %13 = arith.mulf %11, %12 : vector<1x256xf32>
    %c0_8 = arith.constant 0 : index
    %c0_9 = arith.constant 0 : index
    %14 = vector.load %arg3[%c0_8, %c0_9] : memref<1x256xf32, #tpu.memory_space<vmem>>, vector<1x256xf32>
    %cst_10 = arith.constant 9.99999974E-6 : f32
    %15 = vector.broadcast %cst_10 : f32 to vector<1x256xf32>
    %16 = arith.addf %13, %15 : vector<1x256xf32>
    %17 = math.rsqrt %16 : vector<1x256xf32>
    %18 = arith.mulf %14, %17 : vector<1x256xf32>
    %19 = vector.broadcast %18 : vector<1x256xf32> to vector<8x256xf32>
    %20 = arith.mulf %9, %19 : vector<8x256xf32>
    %c0_11 = arith.constant 0 : index
    %c0_12 = arith.constant 0 : index
    %21 = vector.load %arg4[%c0_11, %c0_12] : memref<1x256xf32, #tpu.memory_space<vmem>>, vector<1x256xf32>
    %22 = vector.broadcast %21 : vector<1x256xf32> to vector<8x256xf32>
    %23 = arith.addf %20, %22 : vector<8x256xf32>
    %cst_13 = arith.constant 0.000000e+00 : f32
    %24 = vector.broadcast %cst_13 : f32 to vector<8x256xf32>
    %25 = arith.maximumf %23, %24 : vector<8x256xf32>
    %26 = arith.truncf %25 : vector<8x256xf32> to vector<8x256xbf16>
    %c0_14 = arith.constant 0 : index
    %c0_15 = arith.constant 0 : index
    %27 = vector.load %arg5[%c0_14, %c0_15] : memref<256x256xbf16, #tpu.memory_space<vmem>>, vector<256x256xbf16>
    %cst_16 = arith.constant dense<0.000000e+00> : vector<8x256xf32>
    %28 = tpu.matmul %26, %27, %cst_16 {dimension_numbers = #tpu.dot_dimension_numbers<[1], [0], [0], [1], [0, 0, 1, 1], [], []>} : vector<8x256xbf16>, vector<256x256xbf16>, vector<8x256xf32> -> vector<8x256xf32>
    %cst_17 = arith.constant dense<0.000000e+00> : vector<1x256xf32>
    %29 = tpu.matmul %0, %28, %cst_17 {dimension_numbers = #tpu.dot_dimension_numbers<[1], [0], [0], [1], [0, 0, 1, 1], [], []>} : vector<1x8xf32>, vector<8x256xf32>, vector<1x256xf32> -> vector<1x256xf32>
    %cst_18 = arith.constant 1.250000e-01 : f32
    %30 = vector.broadcast %cst_18 : f32 to vector<1x256xf32>
    %31 = arith.mulf %29, %30 : vector<1x256xf32>
    %32 = vector.broadcast %31 : vector<1x256xf32> to vector<8x256xf32>
    %33 = arith.subf %28, %32 : vector<8x256xf32>
    %34 = arith.mulf %33, %33 : vector<8x256xf32>
    %cst_19 = arith.constant dense<0.000000e+00> : vector<1x256xf32>
    %35 = tpu.matmul %0, %34, %cst_19 {dimension_numbers = #tpu.dot_dimension_numbers<[1], [0], [0], [1], [0, 0, 1, 1], [], []>} : vector<1x8xf32>, vector<8x256xf32>, vector<1x256xf32> -> vector<1x256xf32>
    %cst_20 = arith.constant 1.250000e-01 : f32
    %36 = vector.broadcast %cst_20 : f32 to vector<1x256xf32>
    %37 = arith.mulf %35, %36 : vector<1x256xf32>
    %c0_21 = arith.constant 0 : index
    %c0_22 = arith.constant 0 : index
    %38 = vector.load %arg6[%c0_21, %c0_22] : memref<1x256xf32, #tpu.memory_space<vmem>>, vector<1x256xf32>
    %cst_23 = arith.constant 9.99999974E-6 : f32
    %39 = vector.broadcast %cst_23 : f32 to vector<1x256xf32>
    %40 = arith.addf %37, %39 : vector<1x256xf32>
    %41 = math.rsqrt %40 : vector<1x256xf32>
    %42 = arith.mulf %38, %41 : vector<1x256xf32>
    %43 = vector.broadcast %42 : vector<1x256xf32> to vector<8x256xf32>
    %44 = arith.mulf %33, %43 : vector<8x256xf32>
    %c0_24 = arith.constant 0 : index
    %c0_25 = arith.constant 0 : index
    %45 = vector.load %arg7[%c0_24, %c0_25] : memref<1x256xf32, #tpu.memory_space<vmem>>, vector<1x256xf32>
    %46 = vector.broadcast %45 : vector<1x256xf32> to vector<8x256xf32>
    %47 = arith.addf %44, %46 : vector<8x256xf32>
    %cst_26 = arith.constant 0.000000e+00 : f32
    %48 = vector.broadcast %cst_26 : f32 to vector<8x256xf32>
    %49 = arith.maximumf %47, %48 : vector<8x256xf32>
    %50 = arith.truncf %49 : vector<8x256xf32> to vector<8x256xbf16>
    %c0_27 = arith.constant 0 : index
    %c0_28 = arith.constant 0 : index
    %51 = vector.load %arg8[%c0_27, %c0_28] : memref<256x256xbf16, #tpu.memory_space<vmem>>, vector<256x256xbf16>
    %cst_29 = arith.constant dense<0.000000e+00> : vector<8x256xf32>
    %52 = tpu.matmul %50, %51, %cst_29 {dimension_numbers = #tpu.dot_dimension_numbers<[1], [0], [0], [1], [0, 0, 1, 1], [], []>} : vector<8x256xbf16>, vector<256x256xbf16>, vector<8x256xf32> -> vector<8x256xf32>
    %cst_30 = arith.constant dense<0.000000e+00> : vector<1x256xf32>
    %53 = tpu.matmul %0, %52, %cst_30 {dimension_numbers = #tpu.dot_dimension_numbers<[1], [0], [0], [1], [0, 0, 1, 1], [], []>} : vector<1x8xf32>, vector<8x256xf32>, vector<1x256xf32> -> vector<1x256xf32>
    %cst_31 = arith.constant 1.250000e-01 : f32
    %54 = vector.broadcast %cst_31 : f32 to vector<1x256xf32>
    %55 = arith.mulf %53, %54 : vector<1x256xf32>
    %56 = vector.broadcast %55 : vector<1x256xf32> to vector<8x256xf32>
    %57 = arith.subf %52, %56 : vector<8x256xf32>
    %58 = arith.mulf %57, %57 : vector<8x256xf32>
    %cst_32 = arith.constant dense<0.000000e+00> : vector<1x256xf32>
    %59 = tpu.matmul %0, %58, %cst_32 {dimension_numbers = #tpu.dot_dimension_numbers<[1], [0], [0], [1], [0, 0, 1, 1], [], []>} : vector<1x8xf32>, vector<8x256xf32>, vector<1x256xf32> -> vector<1x256xf32>
    %cst_33 = arith.constant 1.250000e-01 : f32
    %60 = vector.broadcast %cst_33 : f32 to vector<1x256xf32>
    %61 = arith.mulf %59, %60 : vector<1x256xf32>
    %c0_34 = arith.constant 0 : index
    %c0_35 = arith.constant 0 : index
    %62 = vector.load %arg9[%c0_34, %c0_35] : memref<1x256xf32, #tpu.memory_space<vmem>>, vector<1x256xf32>
    %cst_36 = arith.constant 9.99999974E-6 : f32
    %63 = vector.broadcast %cst_36 : f32 to vector<1x256xf32>
    %64 = arith.addf %61, %63 : vector<1x256xf32>
    %65 = math.rsqrt %64 : vector<1x256xf32>
    %66 = arith.mulf %62, %65 : vector<1x256xf32>
    %67 = vector.broadcast %66 : vector<1x256xf32> to vector<8x256xf32>
    %68 = arith.mulf %57, %67 : vector<8x256xf32>
    %c0_37 = arith.constant 0 : index
    %c0_38 = arith.constant 0 : index
    %69 = vector.load %arg10[%c0_37, %c0_38] : memref<1x256xf32, #tpu.memory_space<vmem>>, vector<1x256xf32>
    %70 = vector.broadcast %69 : vector<1x256xf32> to vector<8x256xf32>
    %71 = arith.addf %68, %70 : vector<8x256xf32>
    %cst_39 = arith.constant 0.000000e+00 : f32
    %72 = vector.broadcast %cst_39 : f32 to vector<8x256xf32>
    %73 = arith.maximumf %71, %72 : vector<8x256xf32>
    %74 = arith.truncf %73 : vector<8x256xf32> to vector<8x256xbf16>
    %c0_40 = arith.constant 0 : index
    %c0_41 = arith.constant 0 : index
    %75 = vector.load %arg11[%c0_40, %c0_41] : memref<256x128xbf16, #tpu.memory_space<vmem>>, vector<256x128xbf16>
    %cst_42 = arith.constant dense<0.000000e+00> : vector<8x128xf32>
    %76 = tpu.matmul %74, %75, %cst_42 {dimension_numbers = #tpu.dot_dimension_numbers<[1], [0], [0], [1], [0, 0, 1, 1], [], []>} : vector<8x256xbf16>, vector<256x128xbf16>, vector<8x128xf32> -> vector<8x128xf32>
    %c0_43 = arith.constant 0 : index
    %c0_44 = arith.constant 0 : index
    %77 = vector.load %arg12[%c0_43, %c0_44] : memref<1x128xf32, #tpu.memory_space<vmem>>, vector<1x128xf32>
    %78 = vector.broadcast %77 : vector<1x128xf32> to vector<8x128xf32>
    %79 = arith.addf %76, %78 : vector<8x128xf32>
    %c0_45 = arith.constant 0 : index
    %c0_46 = arith.constant 0 : index
    %80 = vector.load %arg13[%c0_45, %c0_46] : memref<8x128xf32, #tpu.memory_space<vmem>>, vector<8x128xf32>
    tpu.vector_store %arg13[%c0_45, %c0_46], %79 {strides = array<i32>} : memref<8x128xf32, #tpu.memory_space<vmem>>, vector<8x128xf32>,
    return
  }
  func.func @transform_0(%arg0: i32) -> (i32, i32) {
    %c0_i32 = arith.constant 0 : i32
    %c0_i32_0 = arith.constant 0 : i32
    %c0_i32_1 = arith.constant 0 : i32
    return %c0_i32, %c0_i32_0 : i32, i32
  }
  func.func @transform_1(%arg0: i32) -> (i32, i32) {
    %c0_i32 = arith.constant 0 : i32
    %c0_i32_0 = arith.constant 0 : i32
    %c0_i32_1 = arith.constant 0 : i32
    return %c0_i32, %c0_i32_0 : i32, i32
  }
  func.func @transform_2(%arg0: i32) -> (i32, i32) {
    %c0_i32 = arith.constant 0 : i32
    %c0_i32_0 = arith.constant 0 : i32
    %c0_i32_1 = arith.constant 0 : i32
    return %c0_i32, %c0_i32_0 : i32, i32
  }
  func.func @transform_3(%arg0: i32) -> (i32, i32) {
    %c0_i32 = arith.constant 0 : i32
    %c0_i32_0 = arith.constant 0 : i32
    %c0_i32_1 = arith.constant 0 : i32
    return %c0_i32, %c0_i32_0 : i32, i32
  }
  func.func @transform_4(%arg0: i32) -> (i32, i32) {
    %c0_i32 = arith.constant 0 : i32
    %c0_i32_0 = arith.constant 0 : i32
    %c0_i32_1 = arith.constant 0 : i32
    return %c0_i32, %c0_i32_0 : i32, i32
  }
  func.func @transform_5(%arg0: i32) -> (i32, i32) {
    %c0_i32 = arith.constant 0 : i32
    %c0_i32_0 = arith.constant 0 : i32
    %c0_i32_1 = arith.constant 0 : i32
    return %c0_i32, %c0_i32_0 : i32, i32
  }
  func.func @transform_6(%arg0: i32) -> (i32, i32) {
    %c0_i32 = arith.constant 0 : i32
    %c0_i32_0 = arith.constant 0 : i32
    %c0_i32_1 = arith.constant 0 : i32
    return %c0_i32, %c0_i32_0 : i32, i32
  }
  func.func @transform_7(%arg0: i32) -> (i32, i32) {
    %c0_i32 = arith.constant 0 : i32
    %c0_i32_0 = arith.constant 0 : i32
    %c0_i32_1 = arith.constant 0 : i32
    return %c0_i32, %c0_i32_0 : i32, i32
  }
  func.func @transform_8(%arg0: i32) -> (i32, i32) {
    %c0_i32 = arith.constant 0 : i32
    %c0_i32_0 = arith.constant 0 : i32
    %c0_i32_1 = arith.constant 0 : i32
    return %c0_i32, %c0_i32_0 : i32, i32
  }
  func.func @transform_9(%arg0: i32) -> (i32, i32) {
    %c0_i32 = arith.constant 0 : i32
    %c0_i32_0 = arith.constant 0 : i32
    %c0_i32_1 = arith.constant 0 : i32
    return %c0_i32, %c0_i32_0 : i32, i32
  }
  func.func @transform_10(%arg0: i32) -> (i32, i32) {
    %c0_i32 = arith.constant 0 : i32
    %c0_i32_0 = arith.constant 0 : i32
    %c0_i32_1 = arith.constant 0 : i32
    return %c0_i32, %c0_i32_0 : i32, i32
  }
  func.func @transform_11(%arg0: i32) -> (i32, i32) {
    %c0_i32 = arith.constant 0 : i32
    %c0_i32_0 = arith.constant 0 : i32
    %c0_i32_1 = arith.constant 0 : i32
    return %c0_i32, %c0_i32_0 : i32, i32
  }
  func.func @transform_12(%arg0: i32) -> (i32, i32) {
    %c0_i32 = arith.constant 0 : i32
    %c0_i32_0 = arith.constant 0 : i32
    %c0_i32_1 = arith.constant 0 : i32
    return %c0_i32, %c0_i32_0 : i32, i32
  }
}

</mosaic_0001>

<llo_original>
// kernel: gaussian_regressor_forward.1
$region0: #{gaussian_regressor_forward.1}
  #allocation0 [shape = 'u32[]', space=smem, size = 0x4, offset = 0x4, fixed_abs, tag = 'smem constant byte address 0x4 - core index']
  #allocation1 [shape = 'u32[144,128]{1,0:T(1,128)}', space=vmem, size = 0x12000, scoped, tag = 'internal scratch']
  %s0 = inlined_call_operand.vmem [shape: f32[8,32], index: 0, kind: input, shape index: {}]
  %s1 = inlined_call_operand.hbm [shape: bf16[32,256], index: 1, kind: input, shape index: {}]
  %s2 = inlined_call_operand.vmem [shape: f32[1,256], index: 2, kind: input, shape index: {}]
  %s3 = inlined_call_operand.vmem [shape: f32[1,256], index: 3, kind: input, shape index: {}]
  %s4 = inlined_call_operand.hbm [shape: bf16[256,256], index: 4, kind: input, shape index: {}]
  %s5 = inlined_call_operand.vmem [shape: f32[1,256], index: 5, kind: input, shape index: {}]
  %s6 = inlined_call_operand.vmem [shape: f32[1,256], index: 6, kind: input, shape index: {}]
  %s7 = inlined_call_operand.hbm [shape: bf16[256,256], index: 7, kind: input, shape index: {}]
  %s8 = inlined_call_operand.hbm [shape: f32[1,256], index: 8, kind: input, shape index: {}]
  %s9 = inlined_call_operand.vmem [shape: f32[1,256], index: 9, kind: input, shape index: {}]
  %s10 = inlined_call_operand.hbm [shape: bf16[256,128], index: 10, kind: input, shape index: {}]
  %s11 = inlined_call_operand.vmem [shape: f32[1,128], index: 11, kind: input, shape index: {}]
  %s12 = inlined_call_operand.vmem [shape: f32[8,128], index: 12, kind: output, shape index: {}]
  %s13 = sld [smem:[#allocation0]]
  $region78: #{gaussian_regressor_forward.1} parent=0
    _
  %s15 = ssub.s32 1, %s13
  %s16 = scalar_select 0, %s15, %s13
  $region1: #{gaussian_regressor_forward.1} parent=0
    #allocation2 [shape = 'u8[16384]{0}', space=vmem, size = 0x4000, scoped, tag = 'input window, operand 1, single buffered']
    #allocation3 [shape = 's32[1]{0}', space=sflag, size = 0x4, scoped, tag = 'scoped memory for gaussian_regressor_forward.1']
    #allocation4 [shape = 'u8[131072]{0}', space=vmem, size = 0x20000, scoped, tag = 'input window, operand 4, single buffered']
    #allocation5 [shape = 's32[1]{0}', space=sflag, size = 0x4, scoped, tag = 'scoped memory for gaussian_regressor_forward.1']
    #allocation6 [shape = 'u8[131072]{0}', space=vmem, size = 0x20000, scoped, tag = 'input window, operand 7, single buffered']
    #allocation7 [shape = 'u8[1024]{0}', space=vmem, size = 0x400, scoped, tag = 'input window, operand 8, single buffered']
    #allocation8 [shape = 's32[1]{0}', space=sflag, size = 0x4, scoped, tag = 'scoped memory for gaussian_regressor_forward.1']
    #allocation9 [shape = 'u8[65536]{0}', space=vmem, size = 0x10000, scoped, tag = 'input window, operand 10, single buffered']
    %17 = vsyncpa [#allocation3], 0
    %18 = vsyncpa [#allocation5], 0
    %19 = vsyncpa [#allocation8], 0
    // Predicated region
    $region2: #{gaussian_regressor_forward.1} parent=1 // pred_check
      _
    $region3: #{gaussian_regressor_forward.1} parent=1 // pred_check_branch
      %21 = sbr.rel (0) target = $region5
    $region4: #{gaussian_regressor_forward.1} parent=1 // pred_region
      _
    $region5: #{gaussian_regressor_forward.1} parent=1 // pred_fallthru
      _
    // Predicated region
    $region6: #{gaussian_regressor_forward.1} parent=1 // pred_check
      _
    $region7: #{gaussian_regressor_forward.1} parent=1 // pred_check_branch
      %23 = sbr.rel (0) target = $region9
    $region8: #{gaussian_regressor_forward.1} parent=1 // pred_region
      %s25 = ssub.s32 512, 512
      %26 = vsyncadd [#allocation3], %s25
      %s27 = sshll.u32 [#allocation2], 4
      %s28 = int_to_ptr.vmem [resolvable:$true] %s27
      %33 = dma.hbm_to_vmem [thread:$0]  %s1, 512, %s28, [#allocation3], 128, 128, 8
    $region9: #{gaussian_regressor_forward.1} parent=1 // pred_fallthru
      _
    // Predicated region
    $region10: #{gaussian_regressor_forward.1} parent=1 // pred_check
      _
    $region11: #{gaussian_regressor_forward.1} parent=1 // pred_check_branch
      %35 = sbr.rel (0) target = $region13
    $region12: #{gaussian_regressor_forward.1} parent=1 // pred_region
      _
    $region13: #{gaussian_regressor_forward.1} parent=1 // pred_fallthru
      _
    // Predicated region
    $region14: #{gaussian_regressor_forward.1} parent=1 // pred_check
      _
    $region15: #{gaussian_regressor_forward.1} parent=1 // pred_check_branch
      %37 = sbr.rel (0) target = $region17
    $region16: #{gaussian_regressor_forward.1} parent=1 // pred_region
      _
    $region17: #{gaussian_regressor_forward.1} parent=1 // pred_fallthru
      _
    // Predicated region
    $region18: #{gaussian_regressor_forward.1} parent=1 // pred_check
      _
    $region19: #{gaussian_regressor_forward.1} parent=1 // pred_check_branch
      %39 = sbr.rel (0) target = $region21
    $region20: #{gaussian_regressor_forward.1} parent=1 // pred_region
      %s41 = ssub.s32 4096, 4096
      %42 = vsyncadd [#allocation5], %s41
      %s43 = sshll.u32 [#allocation4], 4
      %s44 = int_to_ptr.vmem [resolvable:$true] %s43
      %49 = dma.hbm_to_vmem [thread:$0]  %s4, 4096, %s44, [#allocation5], 128, 128, 8
    $region21: #{gaussian_regressor_forward.1} parent=1 // pred_fallthru
      _
    // Predicated region
    $region22: #{gaussian_regressor_forward.1} parent=1 // pred_check
      _
    $region23: #{gaussian_regressor_forward.1} parent=1 // pred_check_branch
      %51 = sbr.rel (0) target = $region25
    $region24: #{gaussian_regressor_forward.1} parent=1 // pred_region
      _
    $region25: #{gaussian_regressor_forward.1} parent=1 // pred_fallthru
      _
    // Predicated region
    $region26: #{gaussian_regressor_forward.1} parent=1 // pred_check
      _
    $region27: #{gaussian_regressor_forward.1} parent=1 // pred_check_branch
      %53 = sbr.rel (0) target = $region29
    $region28: #{gaussian_regressor_forward.1} parent=1 // pred_region
      _
    $region29: #{gaussian_regressor_forward.1} parent=1 // pred_fallthru
      _
    // Predicated region
    $region30: #{gaussian_regressor_forward.1} parent=1 // pred_check
      _
    $region31: #{gaussian_regressor_forward.1} parent=1 // pred_check_branch
      %55 = sbr.rel (0) target = $region33
    $region32: #{gaussian_regressor_forward.1} parent=1 // pred_region
      %s57 = ssub.s32 4096, 4096
      %58 = vsyncadd [#allocation5], %s57
      %s59 = sshll.u32 [#allocation6], 4
      %s60 = int_to_ptr.vmem [resolvable:$true] %s59
      %65 = dma.hbm_to_vmem [thread:$0]  %s7, 4096, %s60, [#allocation5], 128, 128, 8
    $region33: #{gaussian_regressor_forward.1} parent=1 // pred_fallthru
      _
    // Predicated region
    $region34: #{gaussian_regressor_forward.1} parent=1 // pred_check
      _
    $region35: #{gaussian_regressor_forward.1} parent=1 // pred_check_branch
      %67 = sbr.rel (0) target = $region37
    $region36: #{gaussian_regressor_forward.1} parent=1 // pred_region
      %s69 = ssub.s32 32, 32
      %70 = vsyncadd [#allocation8], %s69
      %s72 = sshll.u32 [#allocation7], 4
      %s73 = int_to_ptr.vmem [resolvable:$true] %s72
      %75 = dma.hbm_to_vmem [thread:$0]  %s8, 32, %s73, [#allocation8]
    $region37: #{gaussian_regressor_forward.1} parent=1 // pred_fallthru
      _
    // Predicated region
    $region38: #{gaussian_regressor_forward.1} parent=1 // pred_check
      _
    $region39: #{gaussian_regressor_forward.1} parent=1 // pred_check_branch
      %77 = sbr.rel (0) target = $region41
    $region40: #{gaussian_regressor_forward.1} parent=1 // pred_region
      _
    $region41: #{gaussian_regressor_forward.1} parent=1 // pred_fallthru
      _
    // Predicated region
    $region42: #{gaussian_regressor_forward.1} parent=1 // pred_check
      _
    $region43: #{gaussian_regressor_forward.1} parent=1 // pred_check_branch
      %79 = sbr.rel (0) target = $region45
    $region44: #{gaussian_regressor_forward.1} parent=1 // pred_region
      %s81 = ssub.s32 2048, 2048
      %82 = vsyncadd [#allocation8], %s81
      %s83 = sshll.u32 [#allocation9], 4
      %s84 = int_to_ptr.vmem [resolvable:$true] %s83
      %89 = dma.hbm_to_vmem [thread:$0]  %s10, 2048, %s84, [#allocation8], 64, 64, 4
    $region45: #{gaussian_regressor_forward.1} parent=1 // pred_fallthru
      _
    // Predicated region
    $region46: #{gaussian_regressor_forward.1} parent=1 // pred_check
      _
    $region47: #{gaussian_regressor_forward.1} parent=1 // pred_check_branch
      %91 = sbr.rel (0) target = $region49
    $region48: #{gaussian_regressor_forward.1} parent=1 // pred_region
      _
    $region49: #{gaussian_regressor_forward.1} parent=1 // pred_fallthru
      _
    // Predicated region
    $region50: #{gaussian_regressor_forward.1} parent=1 // pred_check
      _
    $region51: #{gaussian_regressor_forward.1} parent=1 // pred_check_branch
      %93 = sbr.rel (0) target = $region53
    $region52: #{gaussian_regressor_forward.1} parent=1 // pred_region
      %94 = dma.done [#allocation3], 512
    $region53: #{gaussian_regressor_forward.1} parent=1 // pred_fallthru
      _
    // Predicated region
    $region54: #{gaussian_regressor_forward.1} parent=1 // pred_check
      _
    $region55: #{gaussian_regressor_forward.1} parent=1 // pred_check_branch
      %96 = sbr.rel (0) target = $region57
    $region56: #{gaussian_regressor_forward.1} parent=1 // pred_region
      %97 = dma.done [#allocation5], 4096
    $region57: #{gaussian_regressor_forward.1} parent=1 // pred_fallthru
      _
    // Predicated region
    $region58: #{gaussian_regressor_forward.1} parent=1 // pred_check
      _
    $region59: #{gaussian_regressor_forward.1} parent=1 // pred_check_branch
      %99 = sbr.rel (0) target = $region61
    $region60: #{gaussian_regressor_forward.1} parent=1 // pred_region
      %100 = dma.done [#allocation5], 4096
    $region61: #{gaussian_regressor_forward.1} parent=1 // pred_fallthru
      _
    // Predicated region
    $region62: #{gaussian_regressor_forward.1} parent=1 // pred_check
      _
    $region63: #{gaussian_regressor_forward.1} parent=1 // pred_check_branch
      %102 = sbr.rel (0) target = $region65
    $region64: #{gaussian_regressor_forward.1} parent=1 // pred_region
      %103 = dma.done [#allocation8], 32
    $region65: #{gaussian_regressor_forward.1} parent=1 // pred_fallthru
      _
    // Predicated region
    $region66: #{gaussian_regressor_forward.1} parent=1 // pred_check
      _
    $region67: #{gaussian_regressor_forward.1} parent=1 // pred_check_branch
      %105 = sbr.rel (0) target = $region69
    $region68: #{gaussian_regressor_forward.1} parent=1 // pred_region
      %106 = dma.done [#allocation8], 2048
    $region69: #{gaussian_regressor_forward.1} parent=1 // pred_fallthru
      _
    %v108 = vld [vmem:[%s0] sm:$0xff]
    %v109 = vpack.c.bf16 %v108, %v108
    %v110 = vld [vmem:[#allocation2] sm:$0xff]
    %v111 = vld [vmem:[#allocation2 + $0x8] sm:$0xff]
    %v112 = vld [vmem:[#allocation2 + $0x10] sm:$0xff]
    %v113 = vld [vmem:[#allocation2 + $0x18] sm:$0xff]
    %v118 = vunpack.c.l.b16 %v110
    %v119 = vunpack.c.h.b16 %v110
    %v120 = vunpack.c.l.b16 %v111
    %v121 = vunpack.c.h.b16 %v111
    %v122 = vunpack.c.l.b16 %v112
    %v123 = vunpack.c.h.b16 %v112
    %v124 = vunpack.c.l.b16 %v113
    %v125 = vunpack.c.h.b16 %v113
    %v126 = vpack.c.b16 %v120, %v118
    %v127 = vpack.c.b16 %v121, %v119
    %v128 = vpack.c.b16 %v124, %v122
    %v129 = vpack.c.b16 %v125, %v123
    %vm134 = vcmask 261120
    %v136 = vsel %vm134, %v109, 0
    %138 = vmatprep.subr.bf16.mxu0 0
    %139 = vmatpush1.bf16.msra.mxu0 0
    %140 = vmatprep.subr.bf16.mxu0 0
    %141 = vmatpush1.bf16.msra.mxu0 0
    %142 = vmatprep.subr.bf16.mxu0 0
    %143 = vmatpush1.bf16.msra.mxu0 0
    %144 = vmatprep.subr.bf16.mxu0 0
    %145 = vmatpush1.bf16.msra.mxu0 0
    %146 = vmatprep.subr.bf16.mxu0 0
    %147 = vmatpush1.bf16.msra.mxu0 0
    %148 = vmatprep.subr.bf16.mxu0 0
    %149 = vmatpush1.bf16.msra.mxu0 0
    %150 = vmatprep.subr.bf16.mxu0 %v129
    %151 = vmatpush1.bf16.msra.mxu0 %v128
    %152 = vmatprep.subr.bf16.mxu0 %v127
    %153 = vmatpush1.bf16.msra.mxu0 %v126
    %154 = vmatprep.subr.bf16.mxu0 0
    %155 = vmatpush2.bf16.msra.mxu0 0
    %156 = vmatprep.subr.bf16.mxu0 0
    %157 = vmatpush2.bf16.msra.mxu0 0
    %158 = vmatprep.subr.bf16.mxu0 0
    %159 = vmatpush2.bf16.msra.mxu0 0
    %160 = vmatprep.subr.bf16.mxu0 0
    %161 = vmatpush2.bf16.msra.mxu0 0
    %162 = vmatprep.subr.bf16.mxu0 0
    %163 = vmatpush2.bf16.msra.mxu0 0
    %164 = vmatprep.subr.bf16.mxu0 0
    %165 = vmatpush2.bf16.msra.mxu0 0
    %166 = vmatprep.subr.bf16.mxu0 0
    %167 = vmatpush2.bf16.msra.mxu0 0
    %168 = vmatprep.subr.bf16.mxu0 0
    %169 = vmatpush2.bf16.msra.mxu0 0
    %170 = vmatprep.mubr.bf16.mxu0 0
    %171 = vmatmul.mubr.bf16.gmra.mxu0 %v136
    %v172 = vpop.f32.mrf.mxu0
    %v173 = vadd.f32 0.0, %v172
    %v174 = vpop.f32.mrf.mxu0
    %v175 = vadd.f32 0.0, %v174
    %v176 = vpop.f32.mrf.mxu0
    %v177 = vpop.f32.mrf.mxu0
    %178 = vdwg.mxu0
    %vm179 = vcmask 64512
    %v181 = vsel %vm179, 1.0, 0
    %183 = vmatprep.subr.mxu0 0.0
    %184 = vmatpush1.msra.mxu0 0.0
    %185 = vmatprep.subr.mxu0 0.0
    %186 = vmatpush1.msra.mxu0 0.0
    %187 = vmatprep.subr.mxu0 0.0
    %188 = vmatpush1.msra.mxu0 0.0
    %189 = vmatprep.subr.mxu0 0.0
    %190 = vmatpush1.msra.mxu0 0.0
    %191 = vmatprep.subr.mxu0 0.0
    %192 = vmatpush1.msra.mxu0 0.0
    %193 = vmatprep.subr.mxu0 0.0
    %194 = vmatpush1.msra.mxu0 0.0
    %195 = vmatprep.subr.mxu0 0.0
    %196 = vmatpush1.msra.mxu0 0.0
    %197 = vmatprep.subr.mxu0 0.0
    %198 = vmatpush1.msra.mxu0 0.0
    %199 = vmatprep.subr.mxu0 0.0
    %200 = vmatpush1.msra.mxu0 0.0
    %201 = vmatprep.subr.mxu0 0.0
    %202 = vmatpush1.msra.mxu0 0.0
    %203 = vmatprep.subr.mxu0 0.0
    %204 = vmatpush1.msra.mxu0 0.0
    %205 = vmatprep.subr.mxu0 0.0
    %206 = vmatpush1.msra.mxu0 0.0
    %207 = vmatprep.subr.mxu0 0.0
    %208 = vmatpush1.msra.mxu0 0.0
    %209 = vmatprep.subr.mxu0 0.0
    %210 = vmatpush1.msra.mxu0 0.0
    %211 = vmatprep.subr.mxu0 0.0
    %212 = vmatpush1.msra.mxu0 0.0
    %213 = vmatprep.subr.mxu0 %v175
    %214 = vmatpush1.msra.mxu0 %v173
    %215 = vmatprep.subr.mxu0 0.0
    %216 = vmatpush2.msra.mxu0 0.0
    %217 = vmatprep.subr.mxu0 0.0
    %218 = vmatpush2.msra.mxu0 0.0
    %219 = vmatprep.subr.mxu0 0.0
    %220 = vmatpush2.msra.mxu0 0.0
    %221 = vmatprep.subr.mxu0 0.0
    %222 = vmatpush2.msra.mxu0 0.0
    %223 = vmatprep.subr.mxu0 0.0
    %224 = vmatpush2.msra.mxu0 0.0
    %225 = vmatprep.subr.mxu0 0.0
    %226 = vmatpush2.msra.mxu0 0.0
    %227 = vmatprep.subr.mxu0 0.0
    %228 = vmatpush2.msra.mxu0 0.0
    %229 = vmatprep.subr.mxu0 0.0
    %230 = vmatpush2.msra.mxu0 0.0
    %231 = vmatprep.subr.mxu0 0.0
    %232 = vmatpush2.msra.mxu0 0.0
    %233 = vmatprep.subr.mxu0 0.0
    %234 = vmatpush2.msra.mxu0 0.0
    %235 = vmatprep.subr.mxu0 0.0
    %236 = vmatpush2.msra.mxu0 0.0
    %237 = vmatprep.subr.mxu0 0.0
    %238 = vmatpush2.msra.mxu0 0.0
    %239 = vmatprep.subr.mxu0 0.0
    %240 = vmatpush2.msra.mxu0 0.0
    %241 = vmatprep.subr.mxu0 0.0
    %242 = vmatpush2.msra.mxu0 0.0
    %243 = vmatprep.subr.mxu0 0.0
    %244 = vmatpush2.msra.mxu0 0.0
    %245 = vmatprep.subr.mxu0 0.0
    %246 = vmatpush2.msra.mxu0 0.0
    %247 = vmatprep.mubr.f32.mxu0 0.0
    %248 = vmatmul.mubr.f32.gmra.mxu0 %v181
    %v249 = vpop.f32.mrf.mxu0
    %v250 = vadd.f32 0.0, %v249
    %v251 = vpop.f32.mrf.mxu0
    %v252 = vadd.f32 0.0, %v251
    %253 = vdwg.mxu0
    %v254 = vmul.f32 %v250, 0.125
    %v255 = vmul.f32 %v252, 0.125
    %v256 = vlaneseq
    %v257 = vshrl.u32 %v256, 7
    %v258 = vsub.s32 0, %v257
    %v259 = vrot.slane %v254, %v258
    %v260 = vlaneseq
    %v261 = vshrl.u32 %v260, 7
    %v262 = vsub.s32 0, %v261
    %v263 = vrot.slane %v255, %v262
    %v264 = vsub.f32 %v173, %v259
    %v265 = vsub.f32 %v175, %v263
    %v266 = vmul.f32 %v264, %v264
    %v267 = vmul.f32 %v265, %v265
    %268 = vmatprep.subr.mxu0 0.0
    %269 = vmatpush1.msra.mxu0 0.0
    %270 = vmatprep.subr.mxu0 0.0
    %271 = vmatpush1.msra.mxu0 0.0
    %272 = vmatprep.subr.mxu0 0.0
    %273 = vmatpush1.msra.mxu0 0.0
    %274 = vmatprep.subr.mxu0 0.0
    %275 = vmatpush1.msra.mxu0 0.0
    %276 = vmatprep.subr.mxu0 0.0
    %277 = vmatpush1.msra.mxu0 0.0
    %278 = vmatprep.subr.mxu0 0.0
    %279 = vmatpush1.msra.mxu0 0.0
    %280 = vmatprep.subr.mxu0 0.0
    %281 = vmatpush1.msra.mxu0 0.0
    %282 = vmatprep.subr.mxu0 0.0
    %283 = vmatpush1.msra.mxu0 0.0
    %284 = vmatprep.subr.mxu0 0.0
    %285 = vmatpush1.msra.mxu0 0.0
    %286 = vmatprep.subr.mxu0 0.0
    %287 = vmatpush1.msra.mxu0 0.0
    %288 = vmatprep.subr.mxu0 0.0
    %289 = vmatpush1.msra.mxu0 0.0
    %290 = vmatprep.subr.mxu0 0.0
    %291 = vmatpush1.msra.mxu0 0.0
    %292 = vmatprep.subr.mxu0 0.0
    %293 = vmatpush1.msra.mxu0 0.0
    %294 = vmatprep.subr.mxu0 0.0
    %295 = vmatpush1.msra.mxu0 0.0
    %296 = vmatprep.subr.mxu0 0.0
    %297 = vmatpush1.msra.mxu0 0.0
    %298 = vmatprep.subr.mxu0 %v267
    %299 = vmatpush1.msra.mxu0 %v266
    %300 = vmatprep.subr.mxu0 0.0
    %301 = vmatpush2.msra.mxu0 0.0
    %302 = vmatprep.subr.mxu0 0.0
    %303 = vmatpush2.msra.mxu0 0.0
    %304 = vmatprep.subr.mxu0 0.0
    %305 = vmatpush2.msra.mxu0 0.0
    %306 = vmatprep.subr.mxu0 0.0
    %307 = vmatpush2.msra.mxu0 0.0
    %308 = vmatprep.subr.mxu0 0.0
    %309 = vmatpush2.msra.mxu0 0.0
    %310 = vmatprep.subr.mxu0 0.0
    %311 = vmatpush2.msra.mxu0 0.0
    %312 = vmatprep.subr.mxu0 0.0
    %313 = vmatpush2.msra.mxu0 0.0
    %314 = vmatprep.subr.mxu0 0.0
    %315 = vmatpush2.msra.mxu0 0.0
    %316 = vmatprep.subr.mxu0 0.0
    %317 = vmatpush2.msra.mxu0 0.0
    %318 = vmatprep.subr.mxu0 0.0
    %319 = vmatpush2.msra.mxu0 0.0
    %320 = vmatprep.subr.mxu0 0.0
    %321 = vmatpush2.msra.mxu0 0.0
    %322 = vmatprep.subr.mxu0 0.0
    %323 = vmatpush2.msra.mxu0 0.0
    %324 = vmatprep.subr.mxu0 0.0
    %325 = vmatpush2.msra.mxu0 0.0
    %326 = vmatprep.subr.mxu0 0.0
    %327 = vmatpush2.msra.mxu0 0.0
    %328 = vmatprep.subr.mxu0 0.0
    %329 = vmatpush2.msra.mxu0 0.0
    %330 = vmatprep.subr.mxu0 0.0
    %331 = vmatpush2.msra.mxu0 0.0
    %332 = vmatprep.mubr.f32.mxu0 0.0
    %333 = vmatmul.mubr.f32.gmra.mxu0 %v181
    %v334 = vpop.f32.mrf.mxu0
    %v335 = vadd.f32 0.0, %v334
    %v336 = vpop.f32.mrf.mxu0
    %v337 = vadd.f32 0.0, %v336
    %338 = vdwg.mxu0
    %v339 = vmul.f32 %v335, 0.125
    %v340 = vmul.f32 %v337, 0.125
    %v341 = vld [vmem:[%s2] sm:$0x3]
    %v342 = vadd.f32 %v339, 1e-05
    %v343 = vadd.f32 %v340, 1e-05
    %v344 = vrsqrt.pop %v342
    %v345 = vrsqrt.pop %v343
    %v348 = vcombine.low %v344, %v345
    %v350 = vunpack.c.l.s4 1966171168
    %v351 = vunpack.c.0.s8 %v350
    %v352 = vlaneseq
    %v353 = vshrl.u32 %v352, 7
    %v354 = vsub.s32 %v351, %v353
    %v355 = vrot.slane %v348, %v354
    %v357 = vunpack.c.l.s4 1966171168
    %v358 = vunpack.c.0.s8 %v357
    %v359 = vlaneseq
    %v360 = vshrl.u32 %v359, 7
    %v361 = vsub.s32 %v358, %v360
    %v362 = vrot.slane %v355, %v361
    %v364 = vmul.f32 %v341, %v362
    %v366 = vlaneseq
    %v367 = vshrl.u32 %v366, 7
    %v368 = vsub.s32 0, %v367
    %v369 = vrot.slane %v364, %v368
    %v370 = vlaneseq
    %v371 = vshrl.u32 %v370, 7
    %v372 = vsub.s32 1, %v371
    %v373 = vrot.slane %v364, %v372
    %v376 = vmul.f32 %v264, %v369
    %v377 = vmul.f32 %v265, %v373
    %v378 = vld [vmem:[%s3] sm:$0x3]
    %v380 = vlaneseq
    %v381 = vshrl.u32 %v380, 7
    %v382 = vsub.s32 0, %v381
    %v383 = vrot.slane %v378, %v382
    %v384 = vlaneseq
    %v385 = vshrl.u32 %v384, 7
    %v386 = vsub.s32 1, %v385
    %v387 = vrot.slane %v378, %v386
    %v390 = vadd.f32 %v376, %v383
    %v391 = vadd.f32 %v377, %v387
    %v392 = vmax.f32 %v390, 0.0
    %v393 = vmax.f32 %v391, 0.0
    %v394 = vpack.c.bf16 %v392, %v392
    %v395 = vpack.c.bf16 %v393, %v393
    %v396 = vld [vmem:[#allocation4] sm:$0xff]
    %v397 = vld [vmem:[#allocation4 + $0x8] sm:$0xff]
    %v398 = vld [vmem:[#allocation4 + $0x10] sm:$0xff]
    %v399 = vld [vmem:[#allocation4 + $0x18] sm:$0xff]
    %v400 = vld [vmem:[#allocation4 + $0x20] sm:$0xff]
    %v401 = vld [vmem:[#allocation4 + $0x28] sm:$0xff]
    %v402 = vld [vmem:[#allocation4 + $0x30] sm:$0xff]
    %v403 = vld [vmem:[#allocation4 + $0x38] sm:$0xff]
    %v404 = vld [vmem:[#allocation4 + $0x40] sm:$0xff]
    %v405 = vld [vmem:[#allocation4 + $0x48] sm:$0xff]
    %v406 = vld [vmem:[#allocation4 + $0x50] sm:$0xff]
    %v407 = vld [vmem:[#allocation4 + $0x58] sm:$0xff]
    %v408 = vld [vmem:[#allocation4 + $0x60] sm:$0xff]
    %v409 = vld [vmem:[#allocation4 + $0x68] sm:$0xff]
    %v410 = vld [vmem:[#allocation4 + $0x70] sm:$0xff]
    %v411 = vld [vmem:[#allocation4 + $0x78] sm:$0xff]
    %v412 = vld [vmem:[#allocation4 + $0x80] sm:$0xff]
    %v413 = vld [vmem:[#allocation4 + $0x88] sm:$0xff]
    %v414 = vld [vmem:[#allocation4 + $0x90] sm:$0xff]
    %v415 = vld [vmem:[#allocation4 + $0x98] sm:$0xff]
    %v416 = vld [vmem:[#allocation4 + $0xa0] sm:$0xff]
    %v417 = vld [vmem:[#allocation4 + $0xa8] sm:$0xff]
    %v418 = vld [vmem:[#allocation4 + $0xb0] sm:$0xff]
    %v419 = vld [vmem:[#allocation4 + $0xb8] sm:$0xff]
    %v420 = vld [vmem:[#allocation4 + $0xc0] sm:$0xff]
    %v421 = vld [vmem:[#allocation4 + $0xc8] sm:$0xff]
    %v422 = vld [vmem:[#allocation4 + $0xd0] sm:$0xff]
    %v423 = vld [vmem:[#allocation4 + $0xd8] sm:$0xff]
    %v424 = vld [vmem:[#allocation4 + $0xe0] sm:$0xff]
    %v425 = vld [vmem:[#allocation4 + $0xe8] sm:$0xff]
    %v426 = vld [vmem:[#allocation4 + $0xf0] sm:$0xff]
    %v427 = vld [vmem:[#allocation4 + $0xf8] sm:$0xff]
    %v460 = vunpack.c.l.b16 %v396
    %v461 = vunpack.c.h.b16 %v396
    %v462 = vunpack.c.l.b16 %v397
    %v463 = vunpack.c.h.b16 %v397
    %v464 = vunpack.c.l.b16 %v398
    %v465 = vunpack.c.h.b16 %v398
    %v466 = vunpack.c.l.b16 %v399
    %v467 = vunpack.c.h.b16 %v399
    %v468 = vunpack.c.l.b16 %v400
    %v469 = vunpack.c.h.b16 %v400
    %v470 = vunpack.c.l.b16 %v401
    %v471 = vunpack.c.h.b16 %v401
    %v472 = vunpack.c.l.b16 %v402
    %v473 = vunpack.c.h.b16 %v402
    %v474 = vunpack.c.l.b16 %v403
    %v475 = vunpack.c.h.b16 %v403
    %v476 = vunpack.c.l.b16 %v404
    %v477 = vunpack.c.h.b16 %v404
    %v478 = vunpack.c.l.b16 %v405
    %v479 = vunpack.c.h.b16 %v405
    %v480 = vunpack.c.l.b16 %v406
    %v481 = vunpack.c.h.b16 %v406
    %v482 = vunpack.c.l.b16 %v407
    %v483 = vunpack.c.h.b16 %v407
    %v484 = vunpack.c.l.b16 %v408
    %v485 = vunpack.c.h.b16 %v408
    %v486 = vunpack.c.l.b16 %v409
    %v487 = vunpack.c.h.b16 %v409
    %v488 = vunpack.c.l.b16 %v410
    %v489 = vunpack.c.h.b16 %v410
    %v490 = vunpack.c.l.b16 %v411
    %v491 = vunpack.c.h.b16 %v411
    %v492 = vunpack.c.l.b16 %v412
    %v493 = vunpack.c.h.b16 %v412
    %v494 = vunpack.c.l.b16 %v413
    %v495 = vunpack.c.h.b16 %v413
    %v496 = vunpack.c.l.b16 %v414
    %v497 = vunpack.c.h.b16 %v414
    %v498 = vunpack.c.l.b16 %v415
    %v499 = vunpack.c.h.b16 %v415
    %v500 = vunpack.c.l.b16 %v416
    %v501 = vunpack.c.h.b16 %v416
    %v502 = vunpack.c.l.b16 %v417
    %v503 = vunpack.c.h.b16 %v417
    %v504 = vunpack.c.l.b16 %v418
    %v505 = vunpack.c.h.b16 %v418
    %v506 = vunpack.c.l.b16 %v419
    %v507 = vunpack.c.h.b16 %v419
    %v508 = vunpack.c.l.b16 %v420
    %v509 = vunpack.c.h.b16 %v420
    %v510 = vunpack.c.l.b16 %v421
    %v511 = vunpack.c.h.b16 %v421
    %v512 = vunpack.c.l.b16 %v422
    %v513 = vunpack.c.h.b16 %v422
    %v514 = vunpack.c.l.b16 %v423
    %v515 = vunpack.c.h.b16 %v423
    %v516 = vunpack.c.l.b16 %v424
    %v517 = vunpack.c.h.b16 %v424
    %v518 = vunpack.c.l.b16 %v425
    %v519 = vunpack.c.h.b16 %v425
    %v520 = vunpack.c.l.b16 %v426
    %v521 = vunpack.c.h.b16 %v426
    %v522 = vunpack.c.l.b16 %v427
    %v523 = vunpack.c.h.b16 %v427
    %v524 = vpack.c.b16 %v462, %v460
    %v525 = vpack.c.b16 %v463, %v461
    %v526 = vpack.c.b16 %v466, %v464
    %v527 = vpack.c.b16 %v467, %v465
    %v528 = vpack.c.b16 %v470, %v468
    %v529 = vpack.c.b16 %v471, %v469
    %v530 = vpack.c.b16 %v474, %v472
    %v531 = vpack.c.b16 %v475, %v473
    %v532 = vpack.c.b16 %v478, %v476
    %v533 = vpack.c.b16 %v479, %v477
    %v534 = vpack.c.b16 %v482, %v480
    %v535 = vpack.c.b16 %v483, %v481
    %v536 = vpack.c.b16 %v486, %v484
    %v537 = vpack.c.b16 %v487, %v485
    %v538 = vpack.c.b16 %v490, %v488
    %v539 = vpack.c.b16 %v491, %v489
    %v540 = vpack.c.b16 %v494, %v492
    %v541 = vpack.c.b16 %v495, %v493
    %v542 = vpack.c.b16 %v498, %v496
    %v543 = vpack.c.b16 %v499, %v497
    %v544 = vpack.c.b16 %v502, %v500
    %v545 = vpack.c.b16 %v503, %v501
    %v546 = vpack.c.b16 %v506, %v504
    %v547 = vpack.c.b16 %v507, %v505
    %v548 = vpack.c.b16 %v510, %v508
    %v549 = vpack.c.b16 %v511, %v509
    %v550 = vpack.c.b16 %v514, %v512
    %v551 = vpack.c.b16 %v515, %v513
    %v552 = vpack.c.b16 %v518, %v516
    %v553 = vpack.c.b16 %v519, %v517
    %v554 = vpack.c.b16 %v522, %v520
    %v555 = vpack.c.b16 %v523, %v521
    %588 = vmatprep.subr.bf16.mxu0 %v539
    %589 = vmatpush1.bf16.msra.mxu0 %v538
    %590 = vmatprep.subr.bf16.mxu0 %v537
    %591 = vmatpush1.bf16.msra.mxu0 %v536
    %592 = vmatprep.subr.bf16.mxu0 %v535
    %593 = vmatpush1.bf16.msra.mxu0 %v534
    %594 = vmatprep.subr.bf16.mxu0 %v533
    %595 = vmatpush1.bf16.msra.mxu0 %v532
    %596 = vmatprep.subr.bf16.mxu0 %v531
    %597 = vmatpush1.bf16.msra.mxu0 %v530
    %598 = vmatprep.subr.bf16.mxu0 %v529
    %599 = vmatpush1.bf16.msra.mxu0 %v528
    %600 = vmatprep.subr.bf16.mxu0 %v527
    %601 = vmatpush1.bf16.msra.mxu0 %v526
    %602 = vmatprep.subr.bf16.mxu0 %v525
    %603 = vmatpush1.bf16.msra.mxu0 %v524
    %604 = vmatprep.subr.bf16.mxu0 %v555
    %605 = vmatpush2.bf16.msra.mxu0 %v554
    %606 = vmatprep.subr.bf16.mxu0 %v553
    %607 = vmatpush2.bf16.msra.mxu0 %v552
    %608 = vmatprep.subr.bf16.mxu0 %v551
    %609 = vmatpush2.bf16.msra.mxu0 %v550
    %610 = vmatprep.subr.bf16.mxu0 %v549
    %611 = vmatpush2.bf16.msra.mxu0 %v548
    %612 = vmatprep.subr.bf16.mxu0 %v547
    %613 = vmatpush2.bf16.msra.mxu0 %v546
    %614 = vmatprep.subr.bf16.mxu0 %v545
    %615 = vmatpush2.bf16.msra.mxu0 %v544
    %616 = vmatprep.subr.bf16.mxu0 %v543
    %617 = vmatpush2.bf16.msra.mxu0 %v542
    %618 = vmatprep.subr.bf16.mxu0 %v541
    %619 = vmatpush2.bf16.msra.mxu0 %v540
    %620 = vmatprep.mubr.bf16.mxu0 %v395
    %621 = vmatmul.mubr.bf16.gmra.mxu0 %v394
    %v622 = vpop.f32.mrf.mxu0
    %v623 = vadd.f32 0.0, %v622
    %v624 = vpop.f32.mrf.mxu0
    %v625 = vadd.f32 0.0, %v624
    %v626 = vpop.f32.mrf.mxu0
    %v627 = vpop.f32.mrf.mxu0
    %628 = vdwg.mxu0
    %629 = vmatprep.subr.mxu0 0.0
    %630 = vmatpush1.msra.mxu0 0.0
    %631 = vmatprep.subr.mxu0 0.0
    %632 = vmatpush1.msra.mxu0 0.0
    %633 = vmatprep.subr.mxu0 0.0
    %634 = vmatpush1.msra.mxu0 0.0
    %635 = vmatprep.subr.mxu0 0.0
    %636 = vmatpush1.msra.mxu0 0.0
    %637 = vmatprep.subr.mxu0 0.0
    %638 = vmatpush1.msra.mxu0 0.0
    %639 = vmatprep.subr.mxu0 0.0
    %640 = vmatpush1.msra.mxu0 0.0
    %641 = vmatprep.subr.mxu0 0.0
    %642 = vmatpush1.msra.mxu0 0.0
    %643 = vmatprep.subr.mxu0 0.0
    %644 = vmatpush1.msra.mxu0 0.0
    %645 = vmatprep.subr.mxu0 0.0
    %646 = vmatpush1.msra.mxu0 0.0
    %647 = vmatprep.subr.mxu0 0.0
    %648 = vmatpush1.msra.mxu0 0.0
    %649 = vmatprep.subr.mxu0 0.0
    %650 = vmatpush1.msra.mxu0 0.0
    %651 = vmatprep.subr.mxu0 0.0
    %652 = vmatpush1.msra.mxu0 0.0
    %653 = vmatprep.subr.mxu0 0.0
    %654 = vmatpush1.msra.mxu0 0.0
    %655 = vmatprep.subr.mxu0 0.0
    %656 = vmatpush1.msra.mxu0 0.0
    %657 = vmatprep.subr.mxu0 0.0
    %658 = vmatpush1.msra.mxu0 0.0
    %659 = vmatprep.subr.mxu0 %v625
    %660 = vmatpush1.msra.mxu0 %v623
    %661 = vmatprep.subr.mxu0 0.0
    %662 = vmatpush2.msra.mxu0 0.0
    %663 = vmatprep.subr.mxu0 0.0
    %664 = vmatpush2.msra.mxu0 0.0
    %665 = vmatprep.subr.mxu0 0.0
    %666 = vmatpush2.msra.mxu0 0.0
    %667 = vmatprep.subr.mxu0 0.0
    %668 = vmatpush2.msra.mxu0 0.0
    %669 = vmatprep.subr.mxu0 0.0
    %670 = vmatpush2.msra.mxu0 0.0
    %671 = vmatprep.subr.mxu0 0.0
    %672 = vmatpush2.msra.mxu0 0.0
    %673 = vmatprep.subr.mxu0 0.0
    %674 = vmatpush2.msra.mxu0 0.0
    %675 = vmatprep.subr.mxu0 0.0
    %676 = vmatpush2.msra.mxu0 0.0
    %677 = vmatprep.subr.mxu0 0.0
    %678 = vmatpush2.msra.mxu0 0.0
    %679 = vmatprep.subr.mxu0 0.0
    %680 = vmatpush2.msra.mxu0 0.0
    %681 = vmatprep.subr.mxu0 0.0
    %682 = vmatpush2.msra.mxu0 0.0
    %683 = vmatprep.subr.mxu0 0.0
    %684 = vmatpush2.msra.mxu0 0.0
    %685 = vmatprep.subr.mxu0 0.0
    %686 = vmatpush2.msra.mxu0 0.0
    %687 = vmatprep.subr.mxu0 0.0
    %688 = vmatpush2.msra.mxu0 0.0
    %689 = vmatprep.subr.mxu0 0.0
    %690 = vmatpush2.msra.mxu0 0.0
    %691 = vmatprep.subr.mxu0 0.0
    %692 = vmatpush2.msra.mxu0 0.0
    %693 = vmatprep.mubr.f32.mxu0 0.0
    %694 = vmatmul.mubr.f32.gmra.mxu0 %v181
    %v695 = vpop.f32.mrf.mxu0
    %v696 = vadd.f32 0.0, %v695
    %v697 = vpop.f32.mrf.mxu0
    %v698 = vadd.f32 0.0, %v697
    %699 = vdwg.mxu0
    %v700 = vmul.f32 %v696, 0.125
    %v701 = vmul.f32 %v698, 0.125
    %v702 = vlaneseq
    %v703 = vshrl.u32 %v702, 7
    %v704 = vsub.s32 0, %v703
    %v705 = vrot.slane %v700, %v704
    %v706 = vlaneseq
    %v707 = vshrl.u32 %v706, 7
    %v708 = vsub.s32 0, %v707
    %v709 = vrot.slane %v701, %v708
    %v710 = vsub.f32 %v623, %v705
    %v711 = vsub.f32 %v625, %v709
    %v712 = vmul.f32 %v710, %v710
    %v713 = vmul.f32 %v711, %v711
    %714 = vmatprep.subr.mxu0 0.0
    %715 = vmatpush1.msra.mxu0 0.0
    %716 = vmatprep.subr.mxu0 0.0
    %717 = vmatpush1.msra.mxu0 0.0
    %718 = vmatprep.subr.mxu0 0.0
    %719 = vmatpush1.msra.mxu0 0.0
    %720 = vmatprep.subr.mxu0 0.0
    %721 = vmatpush1.msra.mxu0 0.0
    %722 = vmatprep.subr.mxu0 0.0
    %723 = vmatpush1.msra.mxu0 0.0
    %724 = vmatprep.subr.mxu0 0.0
    %725 = vmatpush1.msra.mxu0 0.0
    %726 = vmatprep.subr.mxu0 0.0
    %727 = vmatpush1.msra.mxu0 0.0
    %728 = vmatprep.subr.mxu0 0.0
    %729 = vmatpush1.msra.mxu0 0.0
    %730 = vmatprep.subr.mxu0 0.0
    %731 = vmatpush1.msra.mxu0 0.0
    %732 = vmatprep.subr.mxu0 0.0
    %733 = vmatpush1.msra.mxu0 0.0
    %734 = vmatprep.subr.mxu0 0.0
    %735 = vmatpush1.msra.mxu0 0.0
    %736 = vmatprep.subr.mxu0 0.0
    %737 = vmatpush1.msra.mxu0 0.0
    %738 = vmatprep.subr.mxu0 0.0
    %739 = vmatpush1.msra.mxu0 0.0
    %740 = vmatprep.subr.mxu0 0.0
    %741 = vmatpush1.msra.mxu0 0.0
    %742 = vmatprep.subr.mxu0 0.0
    %743 = vmatpush1.msra.mxu0 0.0
    %744 = vmatprep.subr.mxu0 %v713
    %745 = vmatpush1.msra.mxu0 %v712
    %746 = vmatprep.subr.mxu0 0.0
    %747 = vmatpush2.msra.mxu0 0.0
    %748 = vmatprep.subr.mxu0 0.0
    %749 = vmatpush2.msra.mxu0 0.0
    %750 = vmatprep.subr.mxu0 0.0
    %751 = vmatpush2.msra.mxu0 0.0
    %752 = vmatprep.subr.mxu0 0.0
    %753 = vmatpush2.msra.mxu0 0.0
    %754 = vmatprep.subr.mxu0 0.0
    %755 = vmatpush2.msra.mxu0 0.0
    %756 = vmatprep.subr.mxu0 0.0
    %757 = vmatpush2.msra.mxu0 0.0
    %758 = vmatprep.subr.mxu0 0.0
    %759 = vmatpush2.msra.mxu0 0.0
    %760 = vmatprep.subr.mxu0 0.0
    %761 = vmatpush2.msra.mxu0 0.0
    %762 = vmatprep.subr.mxu0 0.0
    %763 = vmatpush2.msra.mxu0 0.0
    %764 = vmatprep.subr.mxu0 0.0
    %765 = vmatpush2.msra.mxu0 0.0
    %766 = vmatprep.subr.mxu0 0.0
    %767 = vmatpush2.msra.mxu0 0.0
    %768 = vmatprep.subr.mxu0 0.0
    %769 = vmatpush2.msra.mxu0 0.0
    %770 = vmatprep.subr.mxu0 0.0
    %771 = vmatpush2.msra.mxu0 0.0
    %772 = vmatprep.subr.mxu0 0.0
    %773 = vmatpush2.msra.mxu0 0.0
    %774 = vmatprep.subr.mxu0 0.0
    %775 = vmatpush2.msra.mxu0 0.0
    %776 = vmatprep.subr.mxu0 0.0
    %777 = vmatpush2.msra.mxu0 0.0
    %778 = vmatprep.mubr.f32.mxu0 0.0
    %779 = vmatmul.mubr.f32.gmra.mxu0 %v181
    %v780 = vpop.f32.mrf.mxu0
    %v781 = vadd.f32 0.0, %v780
    %v782 = vpop.f32.mrf.mxu0
    %v783 = vadd.f32 0.0, %v782
    %784 = vdwg.mxu0
    %v785 = vmul.f32 %v781, 0.125
    %v786 = vmul.f32 %v783, 0.125
    %v787 = vld [vmem:[%s5] sm:$0x3]
    %v788 = vadd.f32 %v785, 1e-05
    %v789 = vadd.f32 %v786, 1e-05
    %v790 = vrsqrt.pop %v788
    %v791 = vrsqrt.pop %v789
    %v794 = vcombine.low %v790, %v791
    %v796 = vunpack.c.l.s4 1966171168
    %v797 = vunpack.c.0.s8 %v796
    %v798 = vlaneseq
    %v799 = vshrl.u32 %v798, 7
    %v800 = vsub.s32 %v797, %v799
    %v801 = vrot.slane %v794, %v800
    %v803 = vunpack.c.l.s4 1966171168
    %v804 = vunpack.c.0.s8 %v803
    %v805 = vlaneseq
    %v806 = vshrl.u32 %v805, 7
    %v807 = vsub.s32 %v804, %v806
    %v808 = vrot.slane %v801, %v807
    %v810 = vmul.f32 %v787, %v808
    %v812 = vlaneseq
    %v813 = vshrl.u32 %v812, 7
    %v814 = vsub.s32 0, %v813
    %v815 = vrot.slane %v810, %v814
    %v816 = vlaneseq
    %v817 = vshrl.u32 %v816, 7
    %v818 = vsub.s32 1, %v817
    %v819 = vrot.slane %v810, %v818
    %v822 = vmul.f32 %v710, %v815
    %v823 = vmul.f32 %v711, %v819
    %v824 = vld [vmem:[%s6] sm:$0x3]
    %v826 = vlaneseq
    %v827 = vshrl.u32 %v826, 7
    %v828 = vsub.s32 0, %v827
    %v829 = vrot.slane %v824, %v828
    %v830 = vlaneseq
    %v831 = vshrl.u32 %v830, 7
    %v832 = vsub.s32 1, %v831
    %v833 = vrot.slane %v824, %v832
    %v836 = vadd.f32 %v822, %v829
    %v837 = vadd.f32 %v823, %v833
    %v838 = vmax.f32 %v836, 0.0
    %v839 = vmax.f32 %v837, 0.0
    %v840 = vpack.c.bf16 %v838, %v838
    %v841 = vpack.c.bf16 %v839, %v839
    %v842 = vld [vmem:[#allocation6] sm:$0xff]
    %v843 = vld [vmem:[#allocation6 + $0x8] sm:$0xff]
    %v844 = vld [vmem:[#allocation6 + $0x10] sm:$0xff]
    %v845 = vld [vmem:[#allocation6 + $0x18] sm:$0xff]
    %v846 = vld [vmem:[#allocation6 + $0x20] sm:$0xff]
    %v847 = vld [vmem:[#allocation6 + $0x28] sm:$0xff]
    %v848 = vld [vmem:[#allocation6 + $0x30] sm:$0xff]
    %v849 = vld [vmem:[#allocation6 + $0x38] sm:$0xff]
    %v850 = vld [vmem:[#allocation6 + $0x40] sm:$0xff]
    %v851 = vld [vmem:[#allocation6 + $0x48] sm:$0xff]
    %v852 = vld [vmem:[#allocation6 + $0x50] sm:$0xff]
    %v853 = vld [vmem:[#allocation6 + $0x58] sm:$0xff]
    %v854 = vld [vmem:[#allocation6 + $0x60] sm:$0xff]
    %v855 = vld [vmem:[#allocation6 + $0x68] sm:$0xff]
    %v856 = vld [vmem:[#allocation6 + $0x70] sm:$0xff]
    %v857 = vld [vmem:[#allocation6 + $0x78] sm:$0xff]
    %v858 = vld [vmem:[#allocation6 + $0x80] sm:$0xff]
    %v859 = vld [vmem:[#allocation6 + $0x88] sm:$0xff]
    %v860 = vld [vmem:[#allocation6 + $0x90] sm:$0xff]
    %v861 = vld [vmem:[#allocation6 + $0x98] sm:$0xff]
    %v862 = vld [vmem:[#allocation6 + $0xa0] sm:$0xff]
    %v863 = vld [vmem:[#allocation6 + $0xa8] sm:$0xff]
    %v864 = vld [vmem:[#allocation6 + $0xb0] sm:$0xff]
    %v865 = vld [vmem:[#allocation6 + $0xb8] sm:$0xff]
    %v866 = vld [vmem:[#allocation6 + $0xc0] sm:$0xff]
    %v867 = vld [vmem:[#allocation6 + $0xc8] sm:$0xff]
    %v868 = vld [vmem:[#allocation6 + $0xd0] sm:$0xff]
    %v869 = vld [vmem:[#allocation6 + $0xd8] sm:$0xff]
    %v870 = vld [vmem:[#allocation6 + $0xe0] sm:$0xff]
    %v871 = vld [vmem:[#allocation6 + $0xe8] sm:$0xff]
    %v872 = vld [vmem:[#allocation6 + $0xf0] sm:$0xff]
    %v873 = vld [vmem:[#allocation6 + $0xf8] sm:$0xff]
    %v906 = vunpack.c.l.b16 %v842
    %v907 = vunpack.c.h.b16 %v842
    %v908 = vunpack.c.l.b16 %v843
    %v909 = vunpack.c.h.b16 %v843
    %v910 = vunpack.c.l.b16 %v844
    %v911 = vunpack.c.h.b16 %v844
    %v912 = vunpack.c.l.b16 %v845
    %v913 = vunpack.c.h.b16 %v845
    %v914 = vunpack.c.l.b16 %v846
    %v915 = vunpack.c.h.b16 %v846
    %v916 = vunpack.c.l.b16 %v847
    %v917 = vunpack.c.h.b16 %v847
    %v918 = vunpack.c.l.b16 %v848
    %v919 = vunpack.c.h.b16 %v848
    %v920 = vunpack.c.l.b16 %v849
    %v921 = vunpack.c.h.b16 %v849
    %v922 = vunpack.c.l.b16 %v850
    %v923 = vunpack.c.h.b16 %v850
    %v924 = vunpack.c.l.b16 %v851
    %v925 = vunpack.c.h.b16 %v851
    %v926 = vunpack.c.l.b16 %v852
    %v927 = vunpack.c.h.b16 %v852
    %v928 = vunpack.c.l.b16 %v853
    %v929 = vunpack.c.h.b16 %v853
    %v930 = vunpack.c.l.b16 %v854
    %v931 = vunpack.c.h.b16 %v854
    %v932 = vunpack.c.l.b16 %v855
    %v933 = vunpack.c.h.b16 %v855
    %v934 = vunpack.c.l.b16 %v856
    %v935 = vunpack.c.h.b16 %v856
    %v936 = vunpack.c.l.b16 %v857
    %v937 = vunpack.c.h.b16 %v857
    %v938 = vunpack.c.l.b16 %v858
    %v939 = vunpack.c.h.b16 %v858
    %v940 = vunpack.c.l.b16 %v859
    %v941 = vunpack.c.h.b16 %v859
    %v942 = vunpack.c.l.b16 %v860
    %v943 = vunpack.c.h.b16 %v860
    %v944 = vunpack.c.l.b16 %v861
    %v945 = vunpack.c.h.b16 %v861
    %v946 = vunpack.c.l.b16 %v862
    %v947 = vunpack.c.h.b16 %v862
    %v948 = vunpack.c.l.b16 %v863
    %v949 = vunpack.c.h.b16 %v863
    %v950 = vunpack.c.l.b16 %v864
    %v951 = vunpack.c.h.b16 %v864
    %v952 = vunpack.c.l.b16 %v865
    %v953 = vunpack.c.h.b16 %v865
    %v954 = vunpack.c.l.b16 %v866
    %v955 = vunpack.c.h.b16 %v866
    %v956 = vunpack.c.l.b16 %v867
    %v957 = vunpack.c.h.b16 %v867
    %v958 = vunpack.c.l.b16 %v868
    %v959 = vunpack.c.h.b16 %v868
    %v960 = vunpack.c.l.b16 %v869
    %v961 = vunpack.c.h.b16 %v869
    %v962 = vunpack.c.l.b16 %v870
    %v963 = vunpack.c.h.b16 %v870
    %v964 = vunpack.c.l.b16 %v871
    %v965 = vunpack.c.h.b16 %v871
    %v966 = vunpack.c.l.b16 %v872
    %v967 = vunpack.c.h.b16 %v872
    %v968 = vunpack.c.l.b16 %v873
    %v969 = vunpack.c.h.b16 %v873
    %v970 = vpack.c.b16 %v908, %v906
    %v971 = vpack.c.b16 %v909, %v907
    %v972 = vpack.c.b16 %v912, %v910
    %v973 = vpack.c.b16 %v913, %v911
    %v974 = vpack.c.b16 %v916, %v914
    %v975 = vpack.c.b16 %v917, %v915
    %v976 = vpack.c.b16 %v920, %v918
    %v977 = vpack.c.b16 %v921, %v919
    %v978 = vpack.c.b16 %v924, %v922
    %v979 = vpack.c.b16 %v925, %v923
    %v980 = vpack.c.b16 %v928, %v926
    %v981 = vpack.c.b16 %v929, %v927
    %v982 = vpack.c.b16 %v932, %v930
    %v983 = vpack.c.b16 %v933, %v931
    %v984 = vpack.c.b16 %v936, %v934
    %v985 = vpack.c.b16 %v937, %v935
    %v986 = vpack.c.b16 %v940, %v938
    %v987 = vpack.c.b16 %v941, %v939
    %v988 = vpack.c.b16 %v944, %v942
    %v989 = vpack.c.b16 %v945, %v943
    %v990 = vpack.c.b16 %v948, %v946
    %v991 = vpack.c.b16 %v949, %v947
    %v992 = vpack.c.b16 %v952, %v950
    %v993 = vpack.c.b16 %v953, %v951
    %v994 = vpack.c.b16 %v956, %v954
    %v995 = vpack.c.b16 %v957, %v955
    %v996 = vpack.c.b16 %v960, %v958
    %v997 = vpack.c.b16 %v961, %v959
    %v998 = vpack.c.b16 %v964, %v962
    %v999 = vpack.c.b16 %v965, %v963
    %v1000 = vpack.c.b16 %v968, %v966
    %v1001 = vpack.c.b16 %v969, %v967
    %1034 = vmatprep.subr.bf16.mxu0 %v985
    %1035 = vmatpush1.bf16.msra.mxu0 %v984
    %1036 = vmatprep.subr.bf16.mxu0 %v983
    %1037 = vmatpush1.bf16.msra.mxu0 %v982
    %1038 = vmatprep.subr.bf16.mxu0 %v981
    %1039 = vmatpush1.bf16.msra.mxu0 %v980
    %1040 = vmatprep.subr.bf16.mxu0 %v979
    %1041 = vmatpush1.bf16.msra.mxu0 %v978
    %1042 = vmatprep.subr.bf16.mxu0 %v977
    %1043 = vmatpush1.bf16.msra.mxu0 %v976
    %1044 = vmatprep.subr.bf16.mxu0 %v975
    %1045 = vmatpush1.bf16.msra.mxu0 %v974
    %1046 = vmatprep.subr.bf16.mxu0 %v973
    %1047 = vmatpush1.bf16.msra.mxu0 %v972
    %1048 = vmatprep.subr.bf16.mxu0 %v971
    %1049 = vmatpush1.bf16.msra.mxu0 %v970
    %1050 = vmatprep.subr.bf16.mxu0 %v1001
    %1051 = vmatpush2.bf16.msra.mxu0 %v1000
    %1052 = vmatprep.subr.bf16.mxu0 %v999
    %1053 = vmatpush2.bf16.msra.mxu0 %v998
    %1054 = vmatprep.subr.bf16.mxu0 %v997
    %1055 = vmatpush2.bf16.msra.mxu0 %v996
    %1056 = vmatprep.subr.bf16.mxu0 %v995
    %1057 = vmatpush2.bf16.msra.mxu0 %v994
    %1058 = vmatprep.subr.bf16.mxu0 %v993
    %1059 = vmatpush2.bf16.msra.mxu0 %v992
    %1060 = vmatprep.subr.bf16.mxu0 %v991
    %1061 = vmatpush2.bf16.msra.mxu0 %v990
    %1062 = vmatprep.subr.bf16.mxu0 %v989
    %1063 = vmatpush2.bf16.msra.mxu0 %v988
    %1064 = vmatprep.subr.bf16.mxu0 %v987
    %1065 = vmatpush2.bf16.msra.mxu0 %v986
    %1066 = vmatprep.mubr.bf16.mxu0 %v841
    %1067 = vmatmul.mubr.bf16.gmra.mxu0 %v840
    %v1068 = vpop.f32.mrf.mxu0
    %v1069 = vadd.f32 0.0, %v1068
    %v1070 = vpop.f32.mrf.mxu0
    %v1071 = vadd.f32 0.0, %v1070
    %v1072 = vpop.f32.mrf.mxu0
    %v1073 = vpop.f32.mrf.mxu0
    %1074 = vdwg.mxu0
    %1075 = vmatprep.subr.mxu0 0.0
    %1076 = vmatpush1.msra.mxu0 0.0
    %1077 = vmatprep.subr.mxu0 0.0
    %1078 = vmatpush1.msra.mxu0 0.0
    %1079 = vmatprep.subr.mxu0 0.0
    %1080 = vmatpush1.msra.mxu0 0.0
    %1081 = vmatprep.subr.mxu0 0.0
    %1082 = vmatpush1.msra.mxu0 0.0
    %1083 = vmatprep.subr.mxu0 0.0
    %1084 = vmatpush1.msra.mxu0 0.0
    %1085 = vmatprep.subr.mxu0 0.0
    %1086 = vmatpush1.msra.mxu0 0.0
    %1087 = vmatprep.subr.mxu0 0.0
    %1088 = vmatpush1.msra.mxu0 0.0
    %1089 = vmatprep.subr.mxu0 0.0
    %1090 = vmatpush1.msra.mxu0 0.0
    %1091 = vmatprep.subr.mxu0 0.0
    %1092 = vmatpush1.msra.mxu0 0.0
    %1093 = vmatprep.subr.mxu0 0.0
    %1094 = vmatpush1.msra.mxu0 0.0
    %1095 = vmatprep.subr.mxu0 0.0
    %1096 = vmatpush1.msra.mxu0 0.0
    %1097 = vmatprep.subr.mxu0 0.0
    %1098 = vmatpush1.msra.mxu0 0.0
    %1099 = vmatprep.subr.mxu0 0.0
    %1100 = vmatpush1.msra.mxu0 0.0
    %1101 = vmatprep.subr.mxu0 0.0
    %1102 = vmatpush1.msra.mxu0 0.0
    %1103 = vmatprep.subr.mxu0 0.0
    %1104 = vmatpush1.msra.mxu0 0.0
    %1105 = vmatprep.subr.mxu0 %v1071
    %1106 = vmatpush1.msra.mxu0 %v1069
    %1107 = vmatprep.subr.mxu0 0.0
    %1108 = vmatpush2.msra.mxu0 0.0
    %1109 = vmatprep.subr.mxu0 0.0
    %1110 = vmatpush2.msra.mxu0 0.0
    %1111 = vmatprep.subr.mxu0 0.0
    %1112 = vmatpush2.msra.mxu0 0.0
    %1113 = vmatprep.subr.mxu0 0.0
    %1114 = vmatpush2.msra.mxu0 0.0
    %1115 = vmatprep.subr.mxu0 0.0
    %1116 = vmatpush2.msra.mxu0 0.0
    %1117 = vmatprep.subr.mxu0 0.0
    %1118 = vmatpush2.msra.mxu0 0.0
    %1119 = vmatprep.subr.mxu0 0.0
    %1120 = vmatpush2.msra.mxu0 0.0
    %1121 = vmatprep.subr.mxu0 0.0
    %1122 = vmatpush2.msra.mxu0 0.0
    %1123 = vmatprep.subr.mxu0 0.0
    %1124 = vmatpush2.msra.mxu0 0.0
    %1125 = vmatprep.subr.mxu0 0.0
    %1126 = vmatpush2.msra.mxu0 0.0
    %1127 = vmatprep.subr.mxu0 0.0
    %1128 = vmatpush2.msra.mxu0 0.0
    %1129 = vmatprep.subr.mxu0 0.0
    %1130 = vmatpush2.msra.mxu0 0.0
    %1131 = vmatprep.subr.mxu0 0.0
    %1132 = vmatpush2.msra.mxu0 0.0
    %1133 = vmatprep.subr.mxu0 0.0
    %1134 = vmatpush2.msra.mxu0 0.0
    %1135 = vmatprep.subr.mxu0 0.0
    %1136 = vmatpush2.msra.mxu0 0.0
    %1137 = vmatprep.subr.mxu0 0.0
    %1138 = vmatpush2.msra.mxu0 0.0
    %1139 = vmatprep.mubr.f32.mxu0 0.0
    %1140 = vmatmul.mubr.f32.gmra.mxu0 %v181
    %v1141 = vpop.f32.mrf.mxu0
    %v1142 = vadd.f32 0.0, %v1141
    %v1143 = vpop.f32.mrf.mxu0
    %v1144 = vadd.f32 0.0, %v1143
    %1145 = vdwg.mxu0
    %v1146 = vmul.f32 %v1142, 0.125
    %v1147 = vmul.f32 %v1144, 0.125
    %v1148 = vlaneseq
    %v1149 = vshrl.u32 %v1148, 7
    %v1150 = vsub.s32 0, %v1149
    %v1151 = vrot.slane %v1146, %v1150
    %v1152 = vlaneseq
    %v1153 = vshrl.u32 %v1152, 7
    %v1154 = vsub.s32 0, %v1153
    %v1155 = vrot.slane %v1147, %v1154
    %v1156 = vsub.f32 %v1069, %v1151
    %v1157 = vsub.f32 %v1071, %v1155
    %v1158 = vmul.f32 %v1156, %v1156
    %v1159 = vmul.f32 %v1157, %v1157
    %1160 = vmatprep.subr.mxu0 0.0
    %1161 = vmatpush1.msra.mxu0 0.0
    %1162 = vmatprep.subr.mxu0 0.0
    %1163 = vmatpush1.msra.mxu0 0.0
    %1164 = vmatprep.subr.mxu0 0.0
    %1165 = vmatpush1.msra.mxu0 0.0
    %1166 = vmatprep.subr.mxu0 0.0
    %1167 = vmatpush1.msra.mxu0 0.0
    %1168 = vmatprep.subr.mxu0 0.0
    %1169 = vmatpush1.msra.mxu0 0.0
    %1170 = vmatprep.subr.mxu0 0.0
    %1171 = vmatpush1.msra.mxu0 0.0
    %1172 = vmatprep.subr.mxu0 0.0
    %1173 = vmatpush1.msra.mxu0 0.0
    %1174 = vmatprep.subr.mxu0 0.0
    %1175 = vmatpush1.msra.mxu0 0.0
    %1176 = vmatprep.subr.mxu0 0.0
    %1177 = vmatpush1.msra.mxu0 0.0
    %1178 = vmatprep.subr.mxu0 0.0
    %1179 = vmatpush1.msra.mxu0 0.0
    %1180 = vmatprep.subr.mxu0 0.0
    %1181 = vmatpush1.msra.mxu0 0.0
    %1182 = vmatprep.subr.mxu0 0.0
    %1183 = vmatpush1.msra.mxu0 0.0
    %1184 = vmatprep.subr.mxu0 0.0
    %1185 = vmatpush1.msra.mxu0 0.0
    %1186 = vmatprep.subr.mxu0 0.0
    %1187 = vmatpush1.msra.mxu0 0.0
    %1188 = vmatprep.subr.mxu0 0.0
    %1189 = vmatpush1.msra.mxu0 0.0
    %1190 = vmatprep.subr.mxu0 %v1159
    %1191 = vmatpush1.msra.mxu0 %v1158
    %1192 = vmatprep.subr.mxu0 0.0
    %1193 = vmatpush2.msra.mxu0 0.0
    %1194 = vmatprep.subr.mxu0 0.0
    %1195 = vmatpush2.msra.mxu0 0.0
    %1196 = vmatprep.subr.mxu0 0.0
    %1197 = vmatpush2.msra.mxu0 0.0
    %1198 = vmatprep.subr.mxu0 0.0
    %1199 = vmatpush2.msra.mxu0 0.0
    %1200 = vmatprep.subr.mxu0 0.0
    %1201 = vmatpush2.msra.mxu0 0.0
    %1202 = vmatprep.subr.mxu0 0.0
    %1203 = vmatpush2.msra.mxu0 0.0
    %1204 = vmatprep.subr.mxu0 0.0
    %1205 = vmatpush2.msra.mxu0 0.0
    %1206 = vmatprep.subr.mxu0 0.0
    %1207 = vmatpush2.msra.mxu0 0.0
    %1208 = vmatprep.subr.mxu0 0.0
    %1209 = vmatpush2.msra.mxu0 0.0
    %1210 = vmatprep.subr.mxu0 0.0
    %1211 = vmatpush2.msra.mxu0 0.0
    %1212 = vmatprep.subr.mxu0 0.0
    %1213 = vmatpush2.msra.mxu0 0.0
    %1214 = vmatprep.subr.mxu0 0.0
    %1215 = vmatpush2.msra.mxu0 0.0
    %1216 = vmatprep.subr.mxu0 0.0
    %1217 = vmatpush2.msra.mxu0 0.0
    %1218 = vmatprep.subr.mxu0 0.0
    %1219 = vmatpush2.msra.mxu0 0.0
    %1220 = vmatprep.subr.mxu0 0.0
    %1221 = vmatpush2.msra.mxu0 0.0
    %1222 = vmatprep.subr.mxu0 0.0
    %1223 = vmatpush2.msra.mxu0 0.0
    %1224 = vmatprep.mubr.f32.mxu0 0.0
    %1225 = vmatmul.mubr.f32.gmra.mxu0 %v181
    %v1226 = vpop.f32.mrf.mxu0
    %v1227 = vadd.f32 0.0, %v1226
    %v1228 = vpop.f32.mrf.mxu0
    %v1229 = vadd.f32 0.0, %v1228
    %1230 = vdwg.mxu0
    %v1231 = vmul.f32 %v1227, 0.125
    %v1232 = vmul.f32 %v1229, 0.125
    %v1233 = vld [vmem:[#allocation7] sm:$0x3]
    %v1234 = vadd.f32 %v1231, 1e-05
    %v1235 = vadd.f32 %v1232, 1e-05
    %v1236 = vrsqrt.pop %v1234
    %v1237 = vrsqrt.pop %v1235
    %v1240 = vcombine.low %v1236, %v1237
    %v1242 = vunpack.c.l.s4 1966171168
    %v1243 = vunpack.c.0.s8 %v1242
    %v1244 = vlaneseq
    %v1245 = vshrl.u32 %v1244, 7
    %v1246 = vsub.s32 %v1243, %v1245
    %v1247 = vrot.slane %v1240, %v1246
    %v1249 = vunpack.c.l.s4 1966171168
    %v1250 = vunpack.c.0.s8 %v1249
    %v1251 = vlaneseq
    %v1252 = vshrl.u32 %v1251, 7
    %v1253 = vsub.s32 %v1250, %v1252
    %v1254 = vrot.slane %v1247, %v1253
    %v1256 = vmul.f32 %v1233, %v1254
    %v1258 = vlaneseq
    %v1259 = vshrl.u32 %v1258, 7
    %v1260 = vsub.s32 0, %v1259
    %v1261 = vrot.slane %v1256, %v1260
    %v1262 = vlaneseq
    %v1263 = vshrl.u32 %v1262, 7
    %v1264 = vsub.s32 1, %v1263
    %v1265 = vrot.slane %v1256, %v1264
    %v1268 = vmul.f32 %v1156, %v1261
    %v1269 = vmul.f32 %v1157, %v1265
    %v1270 = vld [vmem:[%s9] sm:$0x3]
    %v1272 = vlaneseq
    %v1273 = vshrl.u32 %v1272, 7
    %v1274 = vsub.s32 0, %v1273
    %v1275 = vrot.slane %v1270, %v1274
    %v1276 = vlaneseq
    %v1277 = vshrl.u32 %v1276, 7
    %v1278 = vsub.s32 1, %v1277
    %v1279 = vrot.slane %v1270, %v1278
    %v1282 = vadd.f32 %v1268, %v1275
    %v1283 = vadd.f32 %v1269, %v1279
    %v1284 = vmax.f32 %v1282, 0.0
    %v1285 = vmax.f32 %v1283, 0.0
    %v1286 = vpack.c.bf16 %v1284, %v1284
    %v1287 = vpack.c.bf16 %v1285, %v1285
    %v1288 = vld [vmem:[#allocation9] sm:$0xf]
    %v1289 = vld [vmem:[#allocation9 + $0x4] sm:$0xf]
    %v1290 = vld [vmem:[#allocation9 + $0x8] sm:$0xf]
    %v1291 = vld [vmem:[#allocation9 + $0xc] sm:$0xf]
    %v1292 = vld [vmem:[#allocation9 + $0x10] sm:$0xf]
    %v1293 = vld [vmem:[#allocation9 + $0x14] sm:$0xf]
    %v1294 = vld [vmem:[#allocation9 + $0x18] sm:$0xf]
    %v1295 = vld [vmem:[#allocation9 + $0x1c] sm:$0xf]
    %v1296 = vld [vmem:[#allocation9 + $0x20] sm:$0xf]
    %v1297 = vld [vmem:[#allocation9 + $0x24] sm:$0xf]
    %v1298 = vld [vmem:[#allocation9 + $0x28] sm:$0xf]
    %v1299 = vld [vmem:[#allocation9 + $0x2c] sm:$0xf]
    %v1300 = vld [vmem:[#allocation9 + $0x30] sm:$0xf]
    %v1301 = vld [vmem:[#allocation9 + $0x34] sm:$0xf]
    %v1302 = vld [vmem:[#allocation9 + $0x38] sm:$0xf]
    %v1303 = vld [vmem:[#allocation9 + $0x3c] sm:$0xf]
    %v1304 = vld [vmem:[#allocation9 + $0x40] sm:$0xf]
    %v1305 = vld [vmem:[#allocation9 + $0x44] sm:$0xf]
    %v1306 = vld [vmem:[#allocation9 + $0x48] sm:$0xf]
    %v1307 = vld [vmem:[#allocation9 + $0x4c] sm:$0xf]
    %v1308 = vld [vmem:[#allocation9 + $0x50] sm:$0xf]
    %v1309 = vld [vmem:[#allocation9 + $0x54] sm:$0xf]
    %v1310 = vld [vmem:[#allocation9 + $0x58] sm:$0xf]
    %v1311 = vld [vmem:[#allocation9 + $0x5c] sm:$0xf]
    %v1312 = vld [vmem:[#allocation9 + $0x60] sm:$0xf]
    %v1313 = vld [vmem:[#allocation9 + $0x64] sm:$0xf]
    %v1314 = vld [vmem:[#allocation9 + $0x68] sm:$0xf]
    %v1315 = vld [vmem:[#allocation9 + $0x6c] sm:$0xf]
    %v1316 = vld [vmem:[#allocation9 + $0x70] sm:$0xf]
    %v1317 = vld [vmem:[#allocation9 + $0x74] sm:$0xf]
    %v1318 = vld [vmem:[#allocation9 + $0x78] sm:$0xf]
    %v1319 = vld [vmem:[#allocation9 + $0x7c] sm:$0xf]
    %v1320 = vld [vmem:[%s11] sm:$0x1]
    %v1322 = vlaneseq
    %v1323 = vshrl.u32 %v1322, 7
    %v1324 = vsub.s32 0, %v1323
    %v1325 = vrot.slane %v1320, %v1324
    %v1359 = vunpack.c.l.b16 %v1288
    %v1360 = vunpack.c.l.b16 %v1289
    %v1361 = vunpack.c.l.b16 %v1290
    %v1362 = vunpack.c.l.b16 %v1291
    %v1363 = vunpack.c.l.b16 %v1292
    %v1364 = vunpack.c.l.b16 %v1293
    %v1365 = vunpack.c.l.b16 %v1294
    %v1366 = vunpack.c.l.b16 %v1295
    %v1367 = vunpack.c.l.b16 %v1296
    %v1368 = vunpack.c.l.b16 %v1297
    %v1369 = vunpack.c.l.b16 %v1298
    %v1370 = vunpack.c.l.b16 %v1299
    %v1371 = vunpack.c.l.b16 %v1300
    %v1372 = vunpack.c.l.b16 %v1301
    %v1373 = vunpack.c.l.b16 %v1302
    %v1374 = vunpack.c.l.b16 %v1303
    %v1375 = vunpack.c.l.b16 %v1304
    %v1376 = vunpack.c.l.b16 %v1305
    %v1377 = vunpack.c.l.b16 %v1306
    %v1378 = vunpack.c.l.b16 %v1307
    %v1379 = vunpack.c.l.b16 %v1308
    %v1380 = vunpack.c.l.b16 %v1309
    %v1381 = vunpack.c.l.b16 %v1310
    %v1382 = vunpack.c.l.b16 %v1311
    %v1383 = vunpack.c.l.b16 %v1312
    %v1384 = vunpack.c.l.b16 %v1313
    %v1385 = vunpack.c.l.b16 %v1314
    %v1386 = vunpack.c.l.b16 %v1315
    %v1387 = vunpack.c.l.b16 %v1316
    %v1388 = vunpack.c.l.b16 %v1317
    %v1389 = vunpack.c.l.b16 %v1318
    %v1390 = vunpack.c.l.b16 %v1319
    %v1391 = vpack.c.b16 %v1360, %v1359
    %v1392 = vpack.c.b16 %v1362, %v1361
    %v1393 = vpack.c.b16 %v1364, %v1363
    %v1394 = vpack.c.b16 %v1366, %v1365
    %v1395 = vpack.c.b16 %v1368, %v1367
    %v1396 = vpack.c.b16 %v1370, %v1369
    %v1397 = vpack.c.b16 %v1372, %v1371
    %v1398 = vpack.c.b16 %v1374, %v1373
    %v1399 = vpack.c.b16 %v1376, %v1375
    %v1400 = vpack.c.b16 %v1378, %v1377
    %v1401 = vpack.c.b16 %v1380, %v1379
    %v1402 = vpack.c.b16 %v1382, %v1381
    %v1403 = vpack.c.b16 %v1384, %v1383
    %v1404 = vpack.c.b16 %v1386, %v1385
    %v1405 = vpack.c.b16 %v1388, %v1387
    %v1406 = vpack.c.b16 %v1390, %v1389
    %1423 = vmatprep.subr.bf16.mxu0 0
    %1424 = vmatpush1.bf16.msra.mxu0 %v1398
    %1425 = vmatprep.subr.bf16.mxu0 0
    %1426 = vmatpush1.bf16.msra.mxu0 %v1397
    %1427 = vmatprep.subr.bf16.mxu0 0
    %1428 = vmatpush1.bf16.msra.mxu0 %v1396
    %1429 = vmatprep.subr.bf16.mxu0 0
    %1430 = vmatpush1.bf16.msra.mxu0 %v1395
    %1431 = vmatprep.subr.bf16.mxu0 0
    %1432 = vmatpush1.bf16.msra.mxu0 %v1394
    %1433 = vmatprep.subr.bf16.mxu0 0
    %1434 = vmatpush1.bf16.msra.mxu0 %v1393
    %1435 = vmatprep.subr.bf16.mxu0 0
    %1436 = vmatpush1.bf16.msra.mxu0 %v1392
    %1437 = vmatprep.subr.bf16.mxu0 0
    %1438 = vmatpush1.bf16.msra.mxu0 %v1391
    %1439 = vmatprep.subr.bf16.mxu0 0
    %1440 = vmatpush2.bf16.msra.mxu0 %v1406
    %1441 = vmatprep.subr.bf16.mxu0 0
    %1442 = vmatpush2.bf16.msra.mxu0 %v1405
    %1443 = vmatprep.subr.bf16.mxu0 0
    %1444 = vmatpush2.bf16.msra.mxu0 %v1404
    %1445 = vmatprep.subr.bf16.mxu0 0
    %1446 = vmatpush2.bf16.msra.mxu0 %v1403
    %1447 = vmatprep.subr.bf16.mxu0 0
    %1448 = vmatpush2.bf16.msra.mxu0 %v1402
    %1449 = vmatprep.subr.bf16.mxu0 0
    %1450 = vmatpush2.bf16.msra.mxu0 %v1401
    %1451 = vmatprep.subr.bf16.mxu0 0
    %1452 = vmatpush2.bf16.msra.mxu0 %v1400
    %1453 = vmatprep.subr.bf16.mxu0 0
    %1454 = vmatpush2.bf16.msra.mxu0 %v1399
    %1455 = vmatprep.mubr.bf16.mxu0 %v1287
    %1456 = vmatmul.mubr.bf16.gmra.mxu0 %v1286
    %v1457 = vpop.f32.mrf.mxu0
    %v1458 = vadd.f32 %v1325, %v1457
    %v1459 = vpop.f32.mrf.mxu0
    %v1460 = vpop.f32.mrf.mxu0
    %v1461 = vpop.f32.mrf.mxu0
    %1462 = vdwg.mxu0
    %1463 = vst [vmem:[%s12] sm:$0xff] %v1458
    // Predicated region
    $region70: #{gaussian_regressor_forward.1} parent=1 // pred_check
      _
    $region71: #{gaussian_regressor_forward.1} parent=1 // pred_check_branch
      %1465 = sbr.rel (0) target = $region73
    $region72: #{gaussian_regressor_forward.1} parent=1 // pred_region
      _
    $region73: #{gaussian_regressor_forward.1} parent=1 // pred_fallthru
      _
    // Predicated region
    $region74: #{gaussian_regressor_forward.1} parent=1 // pred_check
      _
    $region75: #{gaussian_regressor_forward.1} parent=1 // pred_check_branch
      %1467 = sbr.rel (0) target = $region77
    $region76: #{gaussian_regressor_forward.1} parent=1 // pred_region
      _
    $region77: #{gaussian_regressor_forward.1} parent=1 // pred_fallthru
      _
    %1468 = vsyncpa [#allocation3], 1
    %1469 = vsyncpa [#allocation5], 1
    %1470 = vsyncpa [#allocation8], 1

</llo_original>
